<compile_context>
chip_gen: v7x
topology: tpu7x:2x2x1
jax: 0.10.0
libtpu: 0.0.40
codegen_flags: <defaults>
</compile_context>

<pallas_src>
import functools

import jax
import jax.numpy as jnp
from jax.experimental import pallas as pl
from jax.experimental.pallas import tpu as pltpu


# ------------------------------ fused kernel -------------------------------- #

def _fused_mca_kernel(x_ref, k_in_ref, v_in_ref,
                      wq_ref, wk_ref, wv_ref, wo_ref, bo_ref,
                      o_ref,
                      k_proj_ref, v_proj_ref, o_heads_ref,
                      *, heads, dim_head, op_dtype):
    nn = (((1,), (0,)), ((), ()))   # A @ B
    nt = (((1,), (1,)), ((), ()))   # A @ B^T  (contract last dims, no k.T copy)

    # ---- K/V projections: computed ONCE per batch and cached in VMEM scratch.
    #      The q-tile grid axis is "arbitrary", so the scratch carries across the
    #      whole q-tile sweep of the current batch (recomputed when qi == 0). ----
    @pl.when(pl.program_id(1) == 0)
    def _():
        kin = k_in_ref[0].astype(op_dtype)                            # (M, Dk)
        vin = v_in_ref[0].astype(op_dtype)                            # (M, Dv)
        k_proj_ref[...] = jax.lax.dot_general(
            kin, wk_ref[...], nn,
            preferred_element_type=jnp.float32).astype(op_dtype)      # (M, inner)
        v_proj_ref[...] = jax.lax.dot_general(
            vin, wv_ref[...], nn,
            preferred_element_type=jnp.float32).astype(op_dtype)      # (M, inner)

    # ---- Q projection for this q-tile (attention scale pre-folded into Wq). ----
    x = x_ref[0].astype(op_dtype)                                     # (TN, Dq)
    q = jax.lax.dot_general(x, wq_ref[...], nn,
                            preferred_element_type=jnp.float32
                            ).astype(op_dtype)                        # (TN, inner)

    # ---- Per-head attention. Heads are static column slices (no reshape /
    #      transpose).  Each head's output is staged into o_heads so the output
    #      projection below is a single wide MXU matmul (K = inner, not C). ----
    # TODO(synk): for large `heads`, use lax.fori_loop over a head-major layout
    #             to bound live ranges (static unrolled loop is fine for small H).
    for h in range(heads):
        lo = h * dim_head
        hi = lo + dim_head
        qh = q[:, lo:hi]                                              # (TN, C)
        kh = k_proj_ref[:, lo:hi]                                     # (M,  C)
        vh = v_proj_ref[:, lo:hi]                                     # (M,  C)

        s = jax.lax.dot_general(qh, kh, nt,
                                preferred_element_type=jnp.float32)   # (TN, M)
        m = jnp.max(s, axis=-1, keepdims=True)
        p = jnp.exp(s - m)
        l = jnp.sum(p, axis=-1, keepdims=True)
        oh = jax.lax.dot_general(p.astype(op_dtype), vh, nn,
                                 preferred_element_type=jnp.float32)  # (TN, C)
        # Exact f32 normalization (normalize the (TN, C) PV result, not the
        # (TN, M) scores).
        o_heads_ref[:, lo:hi] = (oh / l).astype(op_dtype)

    # ---- Single output projection: (TN, inner) @ (inner, Dq) + bias, then the
    #      only HBM write of the step (lane-dense last dim = query_dim). ----
    out = jax.lax.dot_general(o_heads_ref[...], wo_ref[...], nn,
                              preferred_element_type=jnp.float32)     # (TN, Dq)
    o_ref[0] = (out + bo_ref[...]).astype(o_ref.dtype)


# ------------------------------- wrappers ------------------------------------ #

def _tpu_budget():
    """(max q-tile rows, scoped VMEM limit) from the local TPU generation.
    128-MiB-VMEM parts (v5e/v6e) get big tiles + a high scoped limit; 64-MiB
    parts (v7x) — or an unavailable query — keep conservative defaults."""
    vmem_cap = 64 << 20
    try:
        vmem_cap = int(pltpu.get_tpu_info().vmem_capacity_bytes)
    except Exception:
        pass
    if vmem_cap >= (100 << 20):
        return 512, 96 << 20
    return 256, 40 << 20


def _pick_q_tile(n, max_tile):
    # Single full-N block when it fits (always a legal block shape); otherwise a
    # fixed multiple-of-8 tile with a cdiv grid.  Query rows are independent
    # throughout the kernel, so a clipped tail block is safe for any N.
    return n if n <= max_tile else max_tile


def _cost_estimate(B, N, M, Dq, Dk, Dv, inner, heads, act_dtype, op_dtype, out_dtype):
    flops = 2 * B * (
        N * Dq * inner        # q projection
        + M * Dk * inner      # k projection (once per batch — cached in scratch)
        + M * Dv * inner      # v projection (once per batch)
        + N * M * inner       # q @ k^T
        + N * M * inner       # p @ v
        + N * inner * Dq      # output projection
    )
    transcendentals = B * heads * N * M            # exp
    act = jnp.dtype(act_dtype).itemsize
    opi = jnp.dtype(op_dtype).itemsize
    bytes_accessed = (
        act * (B * N * Dq + B * M * (Dk + Dv))                 # activations in
        + opi * ((Dq + Dk + Dv) * inner + inner * Dq)          # weights (once per call)
        + 4 * Dq                                               # bias (f32)
        + jnp.dtype(out_dtype).itemsize * B * N * Dq           # output
    )
    return pl.CostEstimate(flops=flops, transcendentals=transcendentals,
                           bytes_accessed=bytes_accessed)


def modulated_cross_attention(x, key, value, params, heads, dim_head,
                              mxu_dtype=jnp.bfloat16):
    """Fused cross-attention forward (mask=None path of the PyTorch module).

    `mxu_dtype` selects the MXU operand dtype for f32 inputs (bf16 is the fast
    path on v5e/v6e/v7x; accumulation and softmax statistics stay f32).  Pass
    None to keep full-f32 MXU operands."""
    B, N, Dq = x.shape
    _, M, Dk = key.shape
    _, _, Dv = value.shape
    inner = heads * dim_head
    scale = float(dim_head) ** -0.5

    op_dtype = jnp.dtype(x.dtype) if mxu_dtype is None else jnp.dtype(mxu_dtype)

    max_tile, vmem_limit = _tpu_budget()
    tn = _pick_q_tile(N, max_tile)
    nqt = pl.cdiv(N, tn)

    # Weight prep happens ONCE per call, outside the kernel:
    #   * fold the attention scale into Wq (removes a (TN, inner) VPU mul/step),
    #   * pre-cast all weights to the MXU operand dtype (halves their DMA in bf16).
    wq = (params["w_q"].astype(jnp.float32) * scale).astype(op_dtype)
    wk = params["w_k"].astype(op_dtype)
    wv = params["w_v"].astype(op_dtype)
    wo = params["w_out"].astype(op_dtype)
    bo = params["b_out"].reshape(1, Dq).astype(jnp.float32)

    kernel = functools.partial(_fused_mca_kernel, heads=heads,
                               dim_head=dim_head, op_dtype=op_dtype)

    return pl.pallas_call(
        kernel,
        out_shape=jax.ShapeDtypeStruct((B, N, Dq), x.dtype),
        grid=(B, nqt),
        in_specs=[
            pl.BlockSpec((1, tn, Dq), lambda b, qi: (b, qi, 0)),   # x (q tiles)
            pl.BlockSpec((1, M, Dk), lambda b, qi: (b, 0, 0)),     # key   (per batch)
            pl.BlockSpec((1, M, Dv), lambda b, qi: (b, 0, 0)),     # value (per batch)
            pl.BlockSpec((Dq, inner), lambda b, qi: (0, 0)),       # Wq (pre-scaled)
            pl.BlockSpec((Dk, inner), lambda b, qi: (0, 0)),       # Wk
            pl.BlockSpec((Dv, inner), lambda b, qi: (0, 0)),       # Wv
            pl.BlockSpec((inner, Dq), lambda b, qi: (0, 0)),       # Wo
            pl.BlockSpec((1, Dq), lambda b, qi: (0, 0)),           # b_out
        ],
        out_specs=pl.BlockSpec((1, tn, Dq), lambda b, qi: (b, qi, 0)),
        scratch_shapes=[
            pltpu.VMEM((M, inner), op_dtype),    # cached projected K (per batch)
            pltpu.VMEM((M, inner), op_dtype),    # cached projected V (per batch)
            pltpu.VMEM((tn, inner), op_dtype),   # per-head outputs, pre-Wo
        ],
        compiler_params=pltpu.CompilerParams(
            # batch axis: megacore-shardable; q-tile axis carries the cached K/V
            # projection scratch, so it must be "arbitrary" (sequential).
            dimension_semantics=("parallel", "arbitrary"),
            vmem_limit_bytes=vmem_limit),
        cost_estimate=_cost_estimate(B, N, M, Dq, Dk, Dv, inner, heads,
                                     x.dtype, op_dtype, x.dtype),
    )(x, key, value, wq, wk, wv, wo, bo)


# ------------------------------- params / ref -------------------------------- #

def init_params(key, query_dim, key_dim, value_dim, heads, dim_head,
                dtype=jnp.float32):
    inner = heads * dim_head
    k1, k2, k3, k4, k5 = jax.random.split(key, 5)

    def lin(k, fan_in, fan_out):
        bound = 1.0 / jnp.sqrt(fan_in)
        return jax.random.uniform(k, (fan_in, fan_out), dtype, -bound, bound)

    return {
        "w_q": lin(k1, query_dim, inner),
        "w_k": lin(k2, key_dim, inner),
        "w_v": lin(k3, value_dim, inner),
        "w_out": lin(k4, inner, query_dim),
        "b_out": jax.random.uniform(
            k5, (query_dim,), dtype,
            -1.0 / jnp.sqrt(inner), 1.0 / jnp.sqrt(inner)),
    }


def reference(x, key, value, params, heads, dim_head):
    hp = jax.lax.Precision.HIGHEST
    inner = heads * dim_head
    scale = float(dim_head) ** -0.5
    B, N, _ = x.shape
    _, M, _ = key.shape
    q = jnp.matmul(x, params["w_q"], precision=hp)
    k = jnp.matmul(key, params["w_k"], precision=hp)
    v = jnp.matmul(value, params["w_v"], precision=hp)
    q = q.reshape(B, N, heads, dim_head).transpose(0, 2, 1, 3)
    k = k.reshape(B, M, heads, dim_head).transpose(0, 2, 1, 3)
    v = v.reshape(B, M, heads, dim_head).transpose(0, 2, 1, 3)
    s = jnp.einsum("bhnc,bhmc->bhnm", q, k, precision=hp) * scale
    p = jax.nn.softmax(s, axis=-1)
    o = jnp.einsum("bhnm,bhmc->bhnc", p, v, precision=hp)
    o = o.transpose(0, 2, 1, 3).reshape(B, N, inner)
    return jnp.matmul(o, params["w_out"], precision=hp) + params["b_out"]


# ---------------------------------- main -------------------------------------- #

if __name__ == "__main__":
    # Small shapes consistent with the module's forward (B, N, query_dim) /
    # (B, M, key_dim) / (B, M, value_dim).
    B, N, M = 2, 16, 8
    query_dim, key_dim, value_dim = 32, 24, 24
    heads, dim_head = 4, 16

    root = jax.random.PRNGKey(0)
    kp, kx, kk, kv = jax.random.split(root, 4)

    params = init_params(kp, query_dim, key_dim, value_dim, heads, dim_head)
    x = jax.random.normal(kx, (B, N, query_dim), jnp.float32)
    key_in = jax.random.normal(kk, (B, M, key_dim), jnp.float32)
    value_in = jax.random.normal(kv, (B, M, value_dim), jnp.float32)

    ref = reference(x, key_in, value_in, params, heads, dim_head)

    # 1) Full-f32 MXU operand path (exact).
    out_f32 = modulated_cross_attention(x, key_in, value_in, params,
                                        heads, dim_head, mxu_dtype=None)
    out_f32 = jax.block_until_ready(out_f32)
    assert out_f32.shape == (B, N, query_dim)
    err_f32 = float(jnp.max(jnp.abs(out_f32 - ref)))
    # Tolerance leaves room for MXU f32 multi-pass emulation / reduction order.
    assert err_f32 < 2e-2, f"f32 path mismatch vs reference (max abs err {err_f32})"

    # 2) bf16 MXU operand path (fast path recommended for v5e/v6e/v7x); f32
    #    accumulation and f32 softmax statistics are kept, so only operand
    #    rounding contributes — loose absolute tolerance accounts for it.
    out_bf16 = modulated_cross_attention(x, key_in, value_in, params,
                                         heads, dim_head, mxu_dtype=jnp.bfloat16)
    out_bf16 = jax.block_until_ready(out_bf16)
    err_bf16 = float(jnp.max(jnp.abs(out_bf16 - ref)))
    assert err_bf16 < 1e-1, f"bf16 path mismatch vs reference (max abs err {err_bf16})"

    print("KERNEL_OK")
</pallas_src>

<mosaic_0001>
module attributes {stable_mosaic.version = 11 : i64} {
  func.func @_fused_mca_kernel(%arg0: i32, %arg1: i32, %arg2: memref<1x16x32xf32, #tpu.memory_space<vmem>>, %arg3: memref<1x8x24xf32, #tpu.memory_space<vmem>>, %arg4: memref<1x8x24xf32, #tpu.memory_space<vmem>>, %arg5: memref<32x64xf32, #tpu.memory_space<vmem>>, %arg6: memref<24x64xf32, #tpu.memory_space<vmem>>, %arg7: memref<24x64xf32, #tpu.memory_space<vmem>>, %arg8: memref<64x32xf32, #tpu.memory_space<vmem>>, %arg9: memref<1x32xf32, #tpu.memory_space<vmem>>, %arg10: memref<1x16x32xf32, #tpu.memory_space<vmem>>, %arg11: memref<8x64xf32, #tpu.memory_space<vmem>>, %arg12: memref<8x64xf32, #tpu.memory_space<vmem>>, %arg13: memref<16x64xf32, #tpu.memory_space<vmem>>) attributes {dimension_semantics = [#tpu.dimension_semantics<parallel>, #tpu.dimension_semantics<arbitrary>], iteration_bounds = array<i64: 2, 1>, scalar_prefetch = 0 : i64, scratch_operands = 3 : i64, tpu.core_type = #tpu.core_type<tc>, window_params = [{transform_indices = @transform_0, window_bounds = array<i64: 1, 16, 32>}, {transform_indices = @transform_1, window_bounds = array<i64: 1, 8, 24>}, {transform_indices = @transform_2, window_bounds = array<i64: 1, 8, 24>}, {pipeline_mode = #tpu.pipeline_mode<synchronous>, transform_indices = @transform_3, window_bounds = array<i64: 32, 64>}, {pipeline_mode = #tpu.pipeline_mode<synchronous>, transform_indices = @transform_4, window_bounds = array<i64: 24, 64>}, {pipeline_mode = #tpu.pipeline_mode<synchronous>, transform_indices = @transform_5, window_bounds = array<i64: 24, 64>}, {pipeline_mode = #tpu.pipeline_mode<synchronous>, transform_indices = @transform_6, window_bounds = array<i64: 64, 32>}, {pipeline_mode = #tpu.pipeline_mode<synchronous>, transform_indices = @transform_7, window_bounds = array<i64: 1, 32>}, {transform_indices = @transform_8, window_bounds = array<i64: 1, 16, 32>}]} {
    %c0_i32 = arith.constant 0 : i32
    %0 = arith.cmpi eq, %arg1, %c0_i32 : i32
    %1 = arith.extui %0 : i1 to i32
    %c0_i32_0 = arith.constant 0 : i32
    %2 = arith.cmpi ne, %1, %c0_i32_0 : i32
    scf.if %2 {
      %c0_52 = arith.constant 0 : index
      %c0_53 = arith.constant 0 : index
      %c0_54 = arith.constant 0 : index
      %76 = vector.load %arg3[%c0_52, %c0_53, %c0_54] : memref<1x8x24xf32, #tpu.memory_space<vmem>>, vector<1x8x24xf32>
      %77 = vector.shape_cast %76 : vector<1x8x24xf32> to vector<8x24xf32>
      %c0_55 = arith.constant 0 : index
      %c0_56 = arith.constant 0 : index
      %c0_57 = arith.constant 0 : index
      %78 = vector.load %arg4[%c0_55, %c0_56, %c0_57] : memref<1x8x24xf32, #tpu.memory_space<vmem>>, vector<1x8x24xf32>
      %79 = vector.shape_cast %78 : vector<1x8x24xf32> to vector<8x24xf32>
      %c0_58 = arith.constant 0 : index
      %c0_59 = arith.constant 0 : index
      %80 = vector.load %arg6[%c0_58, %c0_59] : memref<24x64xf32, #tpu.memory_space<vmem>>, vector<24x64xf32>
      %cst_60 = arith.constant dense<0.000000e+00> : vector<8x64xf32>
      %81 = tpu.matmul %77, %80, %cst_60 {dimension_numbers = #tpu.dot_dimension_numbers<[1], [0], [0], [1], [0, 0, 1, 1], [], []>} : vector<8x24xf32>, vector<24x64xf32>, vector<8x64xf32> -> vector<8x64xf32>
      %c0_61 = arith.constant 0 : index
      %c0_62 = arith.constant 0 : index
      %82 = vector.load %arg11[%c0_61, %c0_62] : memref<8x64xf32, #tpu.memory_space<vmem>>, vector<8x64xf32>
      tpu.vector_store %arg11[%c0_61, %c0_62], %81 {strides = array<i32>} : memref<8x64xf32, #tpu.memory_space<vmem>>, vector<8x64xf32>,
      %c0_63 = arith.constant 0 : index
      %c0_64 = arith.constant 0 : index
      %83 = vector.load %arg7[%c0_63, %c0_64] : memref<24x64xf32, #tpu.memory_space<vmem>>, vector<24x64xf32>
      %cst_65 = arith.constant dense<0.000000e+00> : vector<8x64xf32>
      %84 = tpu.matmul %79, %83, %cst_65 {dimension_numbers = #tpu.dot_dimension_numbers<[1], [0], [0], [1], [0, 0, 1, 1], [], []>} : vector<8x24xf32>, vector<24x64xf32>, vector<8x64xf32> -> vector<8x64xf32>
      %c0_66 = arith.constant 0 : index
      %c0_67 = arith.constant 0 : index
      %85 = vector.load %arg12[%c0_66, %c0_67] : memref<8x64xf32, #tpu.memory_space<vmem>>, vector<8x64xf32>
      tpu.vector_store %arg12[%c0_66, %c0_67], %84 {strides = array<i32>} : memref<8x64xf32, #tpu.memory_space<vmem>>, vector<8x64xf32>,
    } else {
    }
    %c0 = arith.constant 0 : index
    %c0_1 = arith.constant 0 : index
    %c0_2 = arith.constant 0 : index
    %3 = vector.load %arg2[%c0, %c0_1, %c0_2] : memref<1x16x32xf32, #tpu.memory_space<vmem>>, vector<1x16x32xf32>
    %4 = vector.shape_cast %3 : vector<1x16x32xf32> to vector<16x32xf32>
    %c0_3 = arith.constant 0 : index
    %c0_4 = arith.constant 0 : index
    %5 = vector.load %arg5[%c0_3, %c0_4] : memref<32x64xf32, #tpu.memory_space<vmem>>, vector<32x64xf32>
    %cst = arith.constant dense<0.000000e+00> : vector<16x64xf32>
    %6 = tpu.matmul %4, %5, %cst {dimension_numbers = #tpu.dot_dimension_numbers<[1], [0], [0], [1], [0, 0, 1, 1], [], []>} : vector<16x32xf32>, vector<32x64xf32>, vector<16x64xf32> -> vector<16x64xf32>
    %7 = vector.extract_strided_slice %6 {offsets = [0, 0], sizes = [16, 16], strides = [1, 1]} : vector<16x64xf32> to vector<16x16xf32>
    %c0_5 = arith.constant 0 : index
    %c0_6 = arith.constant 0 : index
    %8 = vector.load %arg11[%c0_5, %c0_6] : memref<8x64xf32, #tpu.memory_space<vmem>>, vector<8x16xf32>
    %c0_7 = arith.constant 0 : index
    %c0_8 = arith.constant 0 : index
    %9 = vector.load %arg12[%c0_7, %c0_8] : memref<8x64xf32, #tpu.memory_space<vmem>>, vector<8x16xf32>
    %cst_9 = arith.constant dense<0.000000e+00> : vector<16x8xf32>
    %10 = tpu.matmul %7, %8, %cst_9 {dimension_numbers = #tpu.dot_dimension_numbers<[1], [1], [0], [0], [0, 0, 1, 0], [], []>} : vector<16x16xf32>, vector<8x16xf32>, vector<16x8xf32> -> vector<16x8xf32>
    %cst_10 = arith.constant dense<0xFF800000> : vector<16xf32>
    %11 = vector.multi_reduction <maximumf>, %10, %cst_10 [1] : vector<16x8xf32> to vector<16xf32>
    %12 = vector.shape_cast %11 : vector<16xf32> to vector<16x1xf32>
    %13 = vector.broadcast %12 : vector<16x1xf32> to vector<16x8xf32>
    %14 = arith.subf %10, %13 : vector<16x8xf32>
    %15 = math.exp %14 : vector<16x8xf32>
    %cst_11 = arith.constant dense<0.000000e+00> : vector<16xf32>
    %16 = vector.multi_reduction <add>, %15, %cst_11 [1] : vector<16x8xf32> to vector<16xf32>
    %17 = vector.shape_cast %16 : vector<16xf32> to vector<16x1xf32>
    %cst_12 = arith.constant dense<0.000000e+00> : vector<16x16xf32>
    %18 = tpu.matmul %15, %9, %cst_12 {dimension_numbers = #tpu.dot_dimension_numbers<[1], [0], [0], [1], [0, 0, 1, 1], [], []>} : vector<16x8xf32>, vector<8x16xf32>, vector<16x16xf32> -> vector<16x16xf32>
    %19 = vector.broadcast %17 : vector<16x1xf32> to vector<16x16xf32>
    %20 = arith.divf %18, %19 : vector<16x16xf32>
    %c0_13 = arith.constant 0 : index
    %c0_14 = arith.constant 0 : index
    %21 = vector.load %arg13[%c0_13, %c0_14] : memref<16x64xf32, #tpu.memory_space<vmem>>, vector<16x16xf32>
    tpu.vector_store %arg13[%c0_13, %c0_14], %20 {strides = array<i32>} : memref<16x64xf32, #tpu.memory_space<vmem>>, vector<16x16xf32>,
    %22 = vector.extract_strided_slice %6 {offsets = [0, 16], sizes = [16, 16], strides = [1, 1]} : vector<16x64xf32> to vector<16x16xf32>
    %c0_15 = arith.constant 0 : index
    %c16 = arith.constant 16 : index
    %23 = vector.load %arg11[%c0_15, %c16] : memref<8x64xf32, #tpu.memory_space<vmem>>, vector<8x16xf32>
    %c0_16 = arith.constant 0 : index
    %c16_17 = arith.constant 16 : index
    %24 = vector.load %arg12[%c0_16, %c16_17] : memref<8x64xf32, #tpu.memory_space<vmem>>, vector<8x16xf32>
    %cst_18 = arith.constant dense<0.000000e+00> : vector<16x8xf32>
    %25 = tpu.matmul %22, %23, %cst_18 {dimension_numbers = #tpu.dot_dimension_numbers<[1], [1], [0], [0], [0, 0, 1, 0], [], []>} : vector<16x16xf32>, vector<8x16xf32>, vector<16x8xf32> -> vector<16x8xf32>
    %cst_19 = arith.constant dense<0xFF800000> : vector<16xf32>
    %26 = vector.multi_reduction <maximumf>, %25, %cst_19 [1] : vector<16x8xf32> to vector<16xf32>
    %27 = vector.shape_cast %26 : vector<16xf32> to vector<16x1xf32>
    %28 = vector.broadcast %27 : vector<16x1xf32> to vector<16x8xf32>
    %29 = arith.subf %25, %28 : vector<16x8xf32>
    %30 = math.exp %29 : vector<16x8xf32>
    %cst_20 = arith.constant dense<0.000000e+00> : vector<16xf32>
    %31 = vector.multi_reduction <add>, %30, %cst_20 [1] : vector<16x8xf32> to vector<16xf32>
    %32 = vector.shape_cast %31 : vector<16xf32> to vector<16x1xf32>
    %cst_21 = arith.constant dense<0.000000e+00> : vector<16x16xf32>
    %33 = tpu.matmul %30, %24, %cst_21 {dimension_numbers = #tpu.dot_dimension_numbers<[1], [0], [0], [1], [0, 0, 1, 1], [], []>} : vector<16x8xf32>, vector<8x16xf32>, vector<16x16xf32> -> vector<16x16xf32>
    %34 = vector.broadcast %32 : vector<16x1xf32> to vector<16x16xf32>
    %35 = arith.divf %33, %34 : vector<16x16xf32>
    %c0_22 = arith.constant 0 : index
    %c16_23 = arith.constant 16 : index
    %36 = vector.load %arg13[%c0_22, %c16_23] : memref<16x64xf32, #tpu.memory_space<vmem>>, vector<16x16xf32>
    tpu.vector_store %arg13[%c0_22, %c16_23], %35 {strides = array<i32>} : memref<16x64xf32, #tpu.memory_space<vmem>>, vector<16x16xf32>,
    %37 = vector.extract_strided_slice %6 {offsets = [0, 32], sizes = [16, 16], strides = [1, 1]} : vector<16x64xf32> to vector<16x16xf32>
    %c0_24 = arith.constant 0 : index
    %c32 = arith.constant 32 : index
    %38 = vector.load %arg11[%c0_24, %c32] : memref<8x64xf32, #tpu.memory_space<vmem>>, vector<8x16xf32>
    %c0_25 = arith.constant 0 : index
    %c32_26 = arith.constant 32 : index
    %39 = vector.load %arg12[%c0_25, %c32_26] : memref<8x64xf32, #tpu.memory_space<vmem>>, vector<8x16xf32>
    %cst_27 = arith.constant dense<0.000000e+00> : vector<16x8xf32>
    %40 = tpu.matmul %37, %38, %cst_27 {dimension_numbers = #tpu.dot_dimension_numbers<[1], [1], [0], [0], [0, 0, 1, 0], [], []>} : vector<16x16xf32>, vector<8x16xf32>, vector<16x8xf32> -> vector<16x8xf32>
    %cst_28 = arith.constant dense<0xFF800000> : vector<16xf32>
    %41 = vector.multi_reduction <maximumf>, %40, %cst_28 [1] : vector<16x8xf32> to vector<16xf32>
    %42 = vector.shape_cast %41 : vector<16xf32> to vector<16x1xf32>
    %43 = vector.broadcast %42 : vector<16x1xf32> to vector<16x8xf32>
    %44 = arith.subf %40, %43 : vector<16x8xf32>
    %45 = math.exp %44 : vector<16x8xf32>
    %cst_29 = arith.constant dense<0.000000e+00> : vector<16xf32>
    %46 = vector.multi_reduction <add>, %45, %cst_29 [1] : vector<16x8xf32> to vector<16xf32>
    %47 = vector.shape_cast %46 : vector<16xf32> to vector<16x1xf32>
    %cst_30 = arith.constant dense<0.000000e+00> : vector<16x16xf32>
    %48 = tpu.matmul %45, %39, %cst_30 {dimension_numbers = #tpu.dot_dimension_numbers<[1], [0], [0], [1], [0, 0, 1, 1], [], []>} : vector<16x8xf32>, vector<8x16xf32>, vector<16x16xf32> -> vector<16x16xf32>
    %49 = vector.broadcast %47 : vector<16x1xf32> to vector<16x16xf32>
    %50 = arith.divf %48, %49 : vector<16x16xf32>
    %c0_31 = arith.constant 0 : index
    %c32_32 = arith.constant 32 : index
    %51 = vector.load %arg13[%c0_31, %c32_32] : memref<16x64xf32, #tpu.memory_space<vmem>>, vector<16x16xf32>
    tpu.vector_store %arg13[%c0_31, %c32_32], %50 {strides = array<i32>} : memref<16x64xf32, #tpu.memory_space<vmem>>, vector<16x16xf32>,
    %52 = vector.extract_strided_slice %6 {offsets = [0, 48], sizes = [16, 16], strides = [1, 1]} : vector<16x64xf32> to vector<16x16xf32>
    %c0_33 = arith.constant 0 : index
    %c48 = arith.constant 48 : index
    %53 = vector.load %arg11[%c0_33, %c48] : memref<8x64xf32, #tpu.memory_space<vmem>>, vector<8x16xf32>
    %c0_34 = arith.constant 0 : index
    %c48_35 = arith.constant 48 : index
    %54 = vector.load %arg12[%c0_34, %c48_35] : memref<8x64xf32, #tpu.memory_space<vmem>>, vector<8x16xf32>
    %cst_36 = arith.constant dense<0.000000e+00> : vector<16x8xf32>
    %55 = tpu.matmul %52, %53, %cst_36 {dimension_numbers = #tpu.dot_dimension_numbers<[1], [1], [0], [0], [0, 0, 1, 0], [], []>} : vector<16x16xf32>, vector<8x16xf32>, vector<16x8xf32> -> vector<16x8xf32>
    %cst_37 = arith.constant dense<0xFF800000> : vector<16xf32>
    %56 = vector.multi_reduction <maximumf>, %55, %cst_37 [1] : vector<16x8xf32> to vector<16xf32>
    %57 = vector.shape_cast %56 : vector<16xf32> to vector<16x1xf32>
    %58 = vector.broadcast %57 : vector<16x1xf32> to vector<16x8xf32>
    %59 = arith.subf %55, %58 : vector<16x8xf32>
    %60 = math.exp %59 : vector<16x8xf32>
    %cst_38 = arith.constant dense<0.000000e+00> : vector<16xf32>
    %61 = vector.multi_reduction <add>, %60, %cst_38 [1] : vector<16x8xf32> to vector<16xf32>
    %62 = vector.shape_cast %61 : vector<16xf32> to vector<16x1xf32>
    %cst_39 = arith.constant dense<0.000000e+00> : vector<16x16xf32>
    %63 = tpu.matmul %60, %54, %cst_39 {dimension_numbers = #tpu.dot_dimension_numbers<[1], [0], [0], [1], [0, 0, 1, 1], [], []>} : vector<16x8xf32>, vector<8x16xf32>, vector<16x16xf32> -> vector<16x16xf32>
    %64 = vector.broadcast %62 : vector<16x1xf32> to vector<16x16xf32>
    %65 = arith.divf %63, %64 : vector<16x16xf32>
    %c0_40 = arith.constant 0 : index
    %c48_41 = arith.constant 48 : index
    %66 = vector.load %arg13[%c0_40, %c48_41] : memref<16x64xf32, #tpu.memory_space<vmem>>, vector<16x16xf32>
    tpu.vector_store %arg13[%c0_40, %c48_41], %65 {strides = array<i32>} : memref<16x64xf32, #tpu.memory_space<vmem>>, vector<16x16xf32>,
    %c0_42 = arith.constant 0 : index
    %c0_43 = arith.constant 0 : index
    %67 = vector.load %arg13[%c0_42, %c0_43] : memref<16x64xf32, #tpu.memory_space<vmem>>, vector<16x64xf32>
    %c0_44 = arith.constant 0 : index
    %c0_45 = arith.constant 0 : index
    %68 = vector.load %arg8[%c0_44, %c0_45] : memref<64x32xf32, #tpu.memory_space<vmem>>, vector<64x32xf32>
    %cst_46 = arith.constant dense<0.000000e+00> : vector<16x32xf32>
    %69 = tpu.matmul %67, %68, %cst_46 {dimension_numbers = #tpu.dot_dimension_numbers<[1], [0], [0], [1], [0, 0, 1, 1], [], []>} : vector<16x64xf32>, vector<64x32xf32>, vector<16x32xf32> -> vector<16x32xf32>
    %c0_47 = arith.constant 0 : index
    %c0_48 = arith.constant 0 : index
    %70 = vector.load %arg9[%c0_47, %c0_48] : memref<1x32xf32, #tpu.memory_space<vmem>>, vector<1x32xf32>
    %71 = vector.broadcast %70 : vector<1x32xf32> to vector<16x32xf32>
    %72 = arith.addf %69, %71 : vector<16x32xf32>
    %c0_49 = arith.constant 0 : index
    %c0_50 = arith.constant 0 : index
    %c0_51 = arith.constant 0 : index
    %73 = vector.load %arg10[%c0_49, %c0_50, %c0_51] : memref<1x16x32xf32, #tpu.memory_space<vmem>>, vector<1x16x32xf32>
    %74 = vector.shape_cast %73 : vector<1x16x32xf32> to vector<16x32xf32>
    %75 = vector.shape_cast %72 : vector<16x32xf32> to vector<1x16x32xf32>
    tpu.vector_store %arg10[%c0_49, %c0_50, %c0_51], %75 {strides = array<i32>} : memref<1x16x32xf32, #tpu.memory_space<vmem>>, vector<1x16x32xf32>,
    return
  }
  func.func @transform_0(%arg0: i32, %arg1: i32) -> (i32, i32, i32) {
    %c0_i32 = arith.constant 0 : i32
    %c0_i32_0 = arith.constant 0 : i32
    return %arg0, %arg1, %c0_i32 : i32, i32, i32
  }
  func.func @transform_1(%arg0: i32, %arg1: i32) -> (i32, i32, i32) {
    %c0_i32 = arith.constant 0 : i32
    %c0_i32_0 = arith.constant 0 : i32
    %c0_i32_1 = arith.constant 0 : i32
    return %arg0, %c0_i32, %c0_i32_0 : i32, i32, i32
  }
  func.func @transform_2(%arg0: i32, %arg1: i32) -> (i32, i32, i32) {
    %c0_i32 = arith.constant 0 : i32
    %c0_i32_0 = arith.constant 0 : i32
    %c0_i32_1 = arith.constant 0 : i32
    return %arg0, %c0_i32, %c0_i32_0 : i32, i32, i32
  }
  func.func @transform_3(%arg0: i32, %arg1: i32) -> (i32, i32) {
    %c0_i32 = arith.constant 0 : i32
    %c0_i32_0 = arith.constant 0 : i32
    %c0_i32_1 = arith.constant 0 : i32
    return %c0_i32, %c0_i32_0 : i32, i32
  }
  func.func @transform_4(%arg0: i32, %arg1: i32) -> (i32, i32) {
    %c0_i32 = arith.constant 0 : i32
    %c0_i32_0 = arith.constant 0 : i32
    %c0_i32_1 = arith.constant 0 : i32
    return %c0_i32, %c0_i32_0 : i32, i32
  }
  func.func @transform_5(%arg0: i32, %arg1: i32) -> (i32, i32) {
    %c0_i32 = arith.constant 0 : i32
    %c0_i32_0 = arith.constant 0 : i32
    %c0_i32_1 = arith.constant 0 : i32
    return %c0_i32, %c0_i32_0 : i32, i32
  }
  func.func @transform_6(%arg0: i32, %arg1: i32) -> (i32, i32) {
    %c0_i32 = arith.constant 0 : i32
    %c0_i32_0 = arith.constant 0 : i32
    %c0_i32_1 = arith.constant 0 : i32
    return %c0_i32, %c0_i32_0 : i32, i32
  }
  func.func @transform_7(%arg0: i32, %arg1: i32) -> (i32, i32) {
    %c0_i32 = arith.constant 0 : i32
    %c0_i32_0 = arith.constant 0 : i32
    %c0_i32_1 = arith.constant 0 : i32
    return %c0_i32, %c0_i32_0 : i32, i32
  }
  func.func @transform_8(%arg0: i32, %arg1: i32) -> (i32, i32, i32) {
    %c0_i32 = arith.constant 0 : i32
    %c0_i32_0 = arith.constant 0 : i32
    return %arg0, %arg1, %c0_i32 : i32, i32, i32
  }
}

</mosaic_0001>

<llo_original>
// kernel: tpu_custom_call.1
$region0: #{tpu_custom_call.1}
  #allocation0 [shape = 'u32[]', space=smem, size = 0x4, offset = 0x4, fixed_abs, tag = 'smem constant byte address 0x4 - core index']
  #allocation1 [shape = 'u32[144,128]{1,0:T(1,128)}', space=vmem, size = 0x12000, scoped, tag = 'internal scratch']
  #allocation2 [shape = 'f32[8,64]{1,0:T(8,128)}', space=vmem, size = 0x1000, scoped, tag = 'scratch operand']
  #allocation3 [shape = 'f32[8,64]{1,0:T(8,128)}', space=vmem, size = 0x1000, scoped, tag = 'scratch operand']
  #allocation4 [shape = 'f32[16,64]{1,0:T(8,128)}', space=vmem, size = 0x2000, scoped, tag = 'scratch operand']
  %s0 = inlined_call_operand.vmem [shape: f32[2,16,32], index: 0, kind: input, shape index: {}]
  %s1 = inlined_call_operand.hbm [shape: f32[2,8,24], index: 1, kind: input, shape index: {}]
  %s2 = inlined_call_operand.hbm [shape: f32[2,8,24], index: 2, kind: input, shape index: {}]
  %s3 = inlined_call_operand.vmem [shape: f32[32,64], index: 3, kind: input, shape index: {}]
  %s4 = inlined_call_operand.vmem [shape: f32[24,64], index: 4, kind: input, shape index: {}]
  %s5 = inlined_call_operand.vmem [shape: f32[24,64], index: 5, kind: input, shape index: {}]
  %s6 = inlined_call_operand.vmem [shape: f32[64,32], index: 6, kind: input, shape index: {}]
  %s7 = inlined_call_operand.vmem [shape: f32[1,32], index: 7, kind: input, shape index: {}]
  %s8 = inlined_call_operand.hbm [shape: f32[2,16,32], index: 8, kind: output, shape index: {}]
  %s9 = sld [smem:[#allocation0]]
  $region77: #{tpu_custom_call.1} parent=0
    _
  %s11 = ssub.s32 1, %s9
  %s12 = scalar_select 0, %s11, %s9
  $region1: #{tpu_custom_call.1} parent=0
    #allocation5 [shape = 'u8[8192]{0}', space=vmem, size = 0x2000, scoped, tag = 'input window, operand 1']
    #allocation6 [shape = 's32[2]{0}', space=sflag, size = 0x8, scoped, tag = 'scoped memory for tpu_custom_call.1']
    #allocation7 [shape = 's32[2]{0}', space=sflag, size = 0x8, scoped, tag = 'scoped memory for tpu_custom_call.1']
    #allocation8 [shape = 'u8[8192]{0}', space=vmem, size = 0x2000, scoped, tag = 'input window, operand 2']
    #allocation9 [shape = 's32[2]{0}', space=sflag, size = 0x8, scoped, tag = 'scoped memory for tpu_custom_call.1']
    #allocation10 [shape = 'u8[16384]{0}', space=vmem, size = 0x4000, scoped, tag = 'output window, operand 0']
    %13 = vsyncpa [#allocation6], 0
    %s14 = scalar_lea.sflag [#allocation6], 1
    %15 = vsyncpa %s14, 0
    %16 = vsyncpa [#allocation9], 0
    %s17 = scalar_lea.sflag [#allocation9], 1
    %18 = vsyncpa %s17, 0
    %19 = vsyncpa [#allocation7], 0
    %s20 = scalar_lea.sflag [#allocation7], 1
    %21 = vsyncpa %s20, 0
    loop: start=0, step=1, limit=4
    $region2: #{tpu_custom_call.1} parent=1 // loop_pre_header
      _
    $region3: #{tpu_custom_call.1} parent=1 // loop_header
      %s23 = sphi 0, %s27
      %p24 = scmp.ge.s32.totalorder %s23, 4
      %s30 = sphi 0, %s42
      %s31 = sphi 0, %s38
      %s32 = sphi 0, %s30
      %s33 = sphi 0, %s31
      %s34 = sphi 0, %s32
      %s35 = sphi 0, %s33
      %s47 = sphi 0, %s49
      %s50 = sphi 0, %s47
      %s51 = sphi 0, %s50
      %s67 = sphi 0, %s51
      %s73 = sphi 0, %s75
      %s76 = sphi 0, %s73
      %s77 = sphi 0, %s76
      %s93 = sphi 0, %s77
      %s99 = sphi 0, %s101
      %s102 = sphi 0, %s99
      %s103 = sphi 0, %s102
      %s119 = sphi 0, %s103
      %s123 = sphi 0, %s123
      %s125 = sphi 0, %s123
      %s126 = sphi 0, %s125
      %s140 = sphi 0, %s126
      %s144 = sphi 0, %s144
      %s146 = sphi 0, %s144
      %s147 = sphi 0, %s146
      %s161 = sphi 0, %s147
      %s165 = sphi 0, %s165
      %s167 = sphi 0, %s165
      %s168 = sphi 0, %s167
      %s182 = sphi 0, %s168
      %s186 = sphi 0, %s186
      %s188 = sphi 0, %s186
      %s189 = sphi 0, %s188
      %s203 = sphi 0, %s189
      %s207 = sphi 0, %s207
      %s209 = sphi 0, %s207
      %s210 = sphi 0, %s209
      %s224 = sphi 0, %s210
      %s232 = sphi 0, %s234
      %s235 = sphi 0, %s232
      %s236 = sphi 0, %s235
      %s252 = sphi 0, %s236
    $region4: #{tpu_custom_call.1} parent=1 // loop_header_branch
      %26 = sbr.rel (%p24) target = $region8
    $region5: #{tpu_custom_call.1} parent=1 // loop_body
      %s28 = ssub.s32 %s23, 1
      %s29 = ssub.s32 %s23, 2
      %s36 = sadd.s32 1, %s31
      %p37 = scmp.ge.s32.totalorder %s36, 1
      %s38 = scalar_select %p37, 0, %s36
      %s39 = sadd.s32 1, %s30
      %s40 = scalar_select %p37, %s39, %s30
      %p41 = scmp.ge.s32.totalorder %s40, 2
      %s42 = scalar_select %p41, 0, %s40
      %s43 = ssub.s32 %s30, %s42
      %s44 = ssub.s32 %s31, %s38
      %s45 = sor.u32 %s43, %s44
      %p46 = scmp.eq.s32.totalorder %s45, 0
      %s48 = sadd.s32 %s47, 1
      %s49 = scalar_select %p46, %s47, %s48
      %p52 = pneg %p46
      %p53 = scmp.eq.s32.totalorder %s23, 1
      %p54 = por %p52, %p53
      %p55 = scmp.ne.s32.totalorder %s47, %s50
      %p56 = scmp.eq.s32.totalorder %s23, 0
      %p57 = por %p55, %p56
      %p58 = scmp.ne.s32.totalorder %s47, %s50
      %p59 = scmp.eq.s32.totalorder %s28, 1
      %p60 = por %p58, %p59
      %p61 = scmp.ne.s32.totalorder %s50, %s51
      %p62 = scmp.eq.s32.totalorder %s28, 0
      %p63 = por %p61, %p62
      %p64 = scmp.ne.s32.totalorder %s50, %s51
      %p65 = scmp.eq.s32.totalorder %s29, 1
      %p66 = por %p64, %p65
      %p68 = scmp.ne.s32.totalorder %s51, %s67
      %p69 = scmp.eq.s32.totalorder %s29, 0
      %p70 = por %p68, %p69
      %s71 = ssub.s32 %s30, %s42
      %p72 = scmp.eq.s32.totalorder %s71, 0
      %s74 = sadd.s32 %s73, 1
      %s75 = scalar_select %p72, %s73, %s74
      %p78 = pneg %p72
      %p79 = scmp.eq.s32.totalorder %s23, 1
      %p80 = por %p78, %p79
      %p81 = scmp.ne.s32.totalorder %s73, %s76
      %p82 = scmp.eq.s32.totalorder %s23, 0
      %p83 = por %p81, %p82
      %p84 = scmp.ne.s32.totalorder %s73, %s76
      %p85 = scmp.eq.s32.totalorder %s28, 1
      %p86 = por %p84, %p85
      %p87 = scmp.ne.s32.totalorder %s76, %s77
      %p88 = scmp.eq.s32.totalorder %s28, 0
      %p89 = por %p87, %p88
      %p90 = scmp.ne.s32.totalorder %s76, %s77
      %p91 = scmp.eq.s32.totalorder %s29, 1
      %p92 = por %p90, %p91
      %p94 = scmp.ne.s32.totalorder %s77, %s93
      %p95 = scmp.eq.s32.totalorder %s29, 0
      %p96 = por %p94, %p95
      %s97 = ssub.s32 %s30, %s42
      %p98 = scmp.eq.s32.totalorder %s97, 0
      %s100 = sadd.s32 %s99, 1
      %s101 = scalar_select %p98, %s99, %s100
      %p104 = pneg %p98
      %p105 = scmp.eq.s32.totalorder %s23, 1
      %p106 = por %p104, %p105
      %p107 = scmp.ne.s32.totalorder %s99, %s102
      %p108 = scmp.eq.s32.totalorder %s23, 0
      %p109 = por %p107, %p108
      %p110 = scmp.ne.s32.totalorder %s99, %s102
      %p111 = scmp.eq.s32.totalorder %s28, 1
      %p112 = por %p110, %p111
      %p113 = scmp.ne.s32.totalorder %s102, %s103
      %p114 = scmp.eq.s32.totalorder %s28, 0
      %p115 = por %p113, %p114
      %p116 = scmp.ne.s32.totalorder %s102, %s103
      %p117 = scmp.eq.s32.totalorder %s29, 1
      %p118 = por %p116, %p117
      %p120 = scmp.ne.s32.totalorder %s103, %s119
      %p121 = scmp.eq.s32.totalorder %s29, 0
      %p122 = por %p120, %p121
      %s124 = sadd.s32 %s123, 1
      %p127 = scmp.eq.s32.totalorder %s23, 1
      %p128 = scmp.ne.s32.totalorder %s123, %s125
      %p129 = scmp.eq.s32.totalorder %s23, 0
      %p130 = por %p128, %p129
      %p131 = scmp.ne.s32.totalorder %s123, %s125
      %p132 = scmp.eq.s32.totalorder %s28, 1
      %p133 = por %p131, %p132
      %p134 = scmp.ne.s32.totalorder %s125, %s126
      %p135 = scmp.eq.s32.totalorder %s28, 0
      %p136 = por %p134, %p135
      %p137 = scmp.ne.s32.totalorder %s125, %s126
      %p138 = scmp.eq.s32.totalorder %s29, 1
      %p139 = por %p137, %p138
      %p141 = scmp.ne.s32.totalorder %s126, %s140
      %p142 = scmp.eq.s32.totalorder %s29, 0
      %p143 = por %p141, %p142
      %s145 = sadd.s32 %s144, 1
      %p148 = scmp.eq.s32.totalorder %s23, 1
      %p149 = scmp.ne.s32.totalorder %s144, %s146
      %p150 = scmp.eq.s32.totalorder %s23, 0
      %p151 = por %p149, %p150
      %p152 = scmp.ne.s32.totalorder %s144, %s146
      %p153 = scmp.eq.s32.totalorder %s28, 1
      %p154 = por %p152, %p153
      %p155 = scmp.ne.s32.totalorder %s146, %s147
      %p156 = scmp.eq.s32.totalorder %s28, 0
      %p157 = por %p155, %p156
      %p158 = scmp.ne.s32.totalorder %s146, %s147
      %p159 = scmp.eq.s32.totalorder %s29, 1
      %p160 = por %p158, %p159
      %p162 = scmp.ne.s32.totalorder %s147, %s161
      %p163 = scmp.eq.s32.totalorder %s29, 0
      %p164 = por %p162, %p163
      %s166 = sadd.s32 %s165, 1
      %p169 = scmp.eq.s32.totalorder %s23, 1
      %p170 = scmp.ne.s32.totalorder %s165, %s167
      %p171 = scmp.eq.s32.totalorder %s23, 0
      %p172 = por %p170, %p171
      %p173 = scmp.ne.s32.totalorder %s165, %s167
      %p174 = scmp.eq.s32.totalorder %s28, 1
      %p175 = por %p173, %p174
      %p176 = scmp.ne.s32.totalorder %s167, %s168
      %p177 = scmp.eq.s32.totalorder %s28, 0
      %p178 = por %p176, %p177
      %p179 = scmp.ne.s32.totalorder %s167, %s168
      %p180 = scmp.eq.s32.totalorder %s29, 1
      %p181 = por %p179, %p180
      %p183 = scmp.ne.s32.totalorder %s168, %s182
      %p184 = scmp.eq.s32.totalorder %s29, 0
      %p185 = por %p183, %p184
      %s187 = sadd.s32 %s186, 1
      %p190 = scmp.eq.s32.totalorder %s23, 1
      %p191 = scmp.ne.s32.totalorder %s186, %s188
      %p192 = scmp.eq.s32.totalorder %s23, 0
      %p193 = por %p191, %p192
      %p194 = scmp.ne.s32.totalorder %s186, %s188
      %p195 = scmp.eq.s32.totalorder %s28, 1
      %p196 = por %p194, %p195
      %p197 = scmp.ne.s32.totalorder %s188, %s189
      %p198 = scmp.eq.s32.totalorder %s28, 0
      %p199 = por %p197, %p198
      %p200 = scmp.ne.s32.totalorder %s188, %s189
      %p201 = scmp.eq.s32.totalorder %s29, 1
      %p202 = por %p200, %p201
      %p204 = scmp.ne.s32.totalorder %s189, %s203
      %p205 = scmp.eq.s32.totalorder %s29, 0
      %p206 = por %p204, %p205
      %s208 = sadd.s32 %s207, 1
      %p211 = scmp.eq.s32.totalorder %s23, 1
      %p212 = scmp.ne.s32.totalorder %s207, %s209
      %p213 = scmp.eq.s32.totalorder %s23, 0
      %p214 = por %p212, %p213
      %p215 = scmp.ne.s32.totalorder %s207, %s209
      %p216 = scmp.eq.s32.totalorder %s28, 1
      %p217 = por %p215, %p216
      %p218 = scmp.ne.s32.totalorder %s209, %s210
      %p219 = scmp.eq.s32.totalorder %s28, 0
      %p220 = por %p218, %p219
      %p221 = scmp.ne.s32.totalorder %s209, %s210
      %p222 = scmp.eq.s32.totalorder %s29, 1
      %p223 = por %p221, %p222
      %p225 = scmp.ne.s32.totalorder %s210, %s224
      %p226 = scmp.eq.s32.totalorder %s29, 0
      %p227 = por %p225, %p226
      %s228 = ssub.s32 %s30, %s42
      %s229 = ssub.s32 %s31, %s38
      %s230 = sor.u32 %s228, %s229
      %p231 = scmp.eq.s32.totalorder %s230, 0
      %s233 = sadd.s32 %s232, 1
      %s234 = scalar_select %p231, %s232, %s233
      %p237 = pneg %p231
      %p238 = scmp.eq.s32.totalorder %s23, 1
      %p239 = por %p237, %p238
      %p240 = scmp.ne.s32.totalorder %s232, %s235
      %p241 = scmp.eq.s32.totalorder %s23, 0
      %p242 = por %p240, %p241
      %p243 = scmp.ne.s32.totalorder %s232, %s235
      %p244 = scmp.eq.s32.totalorder %s28, 1
      %p245 = por %p243, %p244
      %p246 = scmp.ne.s32.totalorder %s235, %s236
      %p247 = scmp.eq.s32.totalorder %s28, 0
      %p248 = por %p246, %p247
      %p249 = scmp.ne.s32.totalorder %s235, %s236
      %p250 = scmp.eq.s32.totalorder %s29, 1
      %p251 = por %p249, %p250
      %p253 = scmp.ne.s32.totalorder %s236, %s252
      %p254 = scmp.eq.s32.totalorder %s29, 0
      %p255 = por %p253, %p254
      %p256 = scmp.le.s32.totalorder 1, %s23
      %p257 = scmp.lt.s32.totalorder %s23, 3
      %p258 = pnand %p256, %p257
      %p259 = pneg %p258
      // Predicated region
      $region9: #{tpu_custom_call.1} parent=5 // pred_check
        _
      $region10: #{tpu_custom_call.1} parent=5 // pred_check_branch
        %261 = sbr.rel (%p258) target = $region12
      $region11: #{tpu_custom_call.1} parent=5 // pred_region
        %s262 = ssub.s32 %s23, 1
        // Predicated region
        $region13: #{tpu_custom_call.1} parent=11 // pred_check
          %p263 = pneg %p136
        $region14: #{tpu_custom_call.1} parent=11 // pred_check_branch
          %265 = sbr.rel (%p263) target = $region16
        $region15: #{tpu_custom_call.1} parent=11 // pred_region
          _
        $region16: #{tpu_custom_call.1} parent=11 // pred_fallthru
          _
        // Predicated region
        $region17: #{tpu_custom_call.1} parent=11 // pred_check
          %p266 = pneg %p157
        $region18: #{tpu_custom_call.1} parent=11 // pred_check_branch
          %268 = sbr.rel (%p266) target = $region20
        $region19: #{tpu_custom_call.1} parent=11 // pred_region
          _
        $region20: #{tpu_custom_call.1} parent=11 // pred_fallthru
          _
        // Predicated region
        $region21: #{tpu_custom_call.1} parent=11 // pred_check
          %p269 = pneg %p178
        $region22: #{tpu_custom_call.1} parent=11 // pred_check_branch
          %271 = sbr.rel (%p269) target = $region24
        $region23: #{tpu_custom_call.1} parent=11 // pred_region
          _
        $region24: #{tpu_custom_call.1} parent=11 // pred_fallthru
          _
        // Predicated region
        $region25: #{tpu_custom_call.1} parent=11 // pred_check
          %p272 = pneg %p199
        $region26: #{tpu_custom_call.1} parent=11 // pred_check_branch
          %274 = sbr.rel (%p272) target = $region28
        $region27: #{tpu_custom_call.1} parent=11 // pred_region
          _
        $region28: #{tpu_custom_call.1} parent=11 // pred_fallthru
          _
        // Predicated region
        $region29: #{tpu_custom_call.1} parent=11 // pred_check
          %p275 = pneg %p220
        $region30: #{tpu_custom_call.1} parent=11 // pred_check_branch
          %277 = sbr.rel (%p275) target = $region32
        $region31: #{tpu_custom_call.1} parent=11 // pred_region
          _
        $region32: #{tpu_custom_call.1} parent=11 // pred_fallthru
          _
      $region12: #{tpu_custom_call.1} parent=5 // pred_fallthru
        _
      %p278 = scmp.lt.s32.totalorder %s23, 2
      // Predicated region
      $region33: #{tpu_custom_call.1} parent=5 // pred_check
        %p279 = pneg %p278
      $region34: #{tpu_custom_call.1} parent=5 // pred_check_branch
        %281 = sbr.rel (%p279) target = $region36
      $region35: #{tpu_custom_call.1} parent=5 // pred_region
        // Predicated region
        $region37: #{tpu_custom_call.1} parent=35 // pred_check
          %p282 = pneg %p57
        $region38: #{tpu_custom_call.1} parent=35 // pred_check_branch
          %284 = sbr.rel (%p282) target = $region40
        $region39: #{tpu_custom_call.1} parent=35 // pred_region
          %s285 = smul.u32 2, %s31
          %p286 = scmp.lt.s32.totalorder %s30, 1
          %s287 = scalar_select %p286, %s30, 1
          %p288 = scmp.lt.s32.totalorder %s285, 1
          %s289 = scalar_select %p288, %s285, 1
          %s290 = smul.addr %s287, 2
          %s291 = sadd.s32 %s289, %s290
          %s292 = smul.addr %s291, 8
          %s293 = scalar_lea.vmem %s0, %s292
          %s294 = smul.u32 2, %s31
        $region40: #{tpu_custom_call.1} parent=35 // pred_fallthru
          _
        // Predicated region
        $region41: #{tpu_custom_call.1} parent=35 // pred_check
          %p295 = pneg %p83
        $region42: #{tpu_custom_call.1} parent=35 // pred_check_branch
          %297 = sbr.rel (%p295) target = $region44
        $region43: #{tpu_custom_call.1} parent=35 // pred_region
          %s298 = sand.u32 %s73, 1
          %s299 = scalar_lea.sflag [#allocation6], %s298
          %s300 = sand.u32 %s73, 1
          %s301 = smul.addr %s300, 8
          %s302 = scalar_lea.vmem [#allocation5], %s301
          %s304 = ssub.s32 128, 128
          %305 = vsyncadd %s299, %s304
          %s306 = smul.addr %s30, 128
          %s307 = scalar_lea.hbm %s1, %s306
          %s309 = sshll.u32 %s302, 4
          %s310 = int_to_ptr.vmem [resolvable:$true] %s309
          %312 = dma.hbm_to_vmem [thread:$0]  %s307, 128, %s310, %s299
        $region44: #{tpu_custom_call.1} parent=35 // pred_fallthru
          _
        // Predicated region
        $region45: #{tpu_custom_call.1} parent=35 // pred_check
          %p313 = pneg %p109
        $region46: #{tpu_custom_call.1} parent=35 // pred_check_branch
          %315 = sbr.rel (%p313) target = $region48
        $region47: #{tpu_custom_call.1} parent=35 // pred_region
          %s316 = sand.u32 %s99, 1
          %s317 = scalar_lea.sflag [#allocation9], %s316
          %s318 = sand.u32 %s99, 1
          %s319 = smul.addr %s318, 8
          %s320 = scalar_lea.vmem [#allocation8], %s319
          %s322 = ssub.s32 128, 128
          %323 = vsyncadd %s317, %s322
          %s324 = smul.addr %s30, 128
          %s325 = scalar_lea.hbm %s2, %s324
          %s327 = sshll.u32 %s320, 4
          %s328 = int_to_ptr.vmem [resolvable:$true] %s327
          %330 = dma.hbm_to_vmem [thread:$0]  %s325, 128, %s328, %s317
        $region48: #{tpu_custom_call.1} parent=35 // pred_fallthru
          _
      $region36: #{tpu_custom_call.1} parent=5 // pred_fallthru
        _
      %p331 = scmp.le.s32.totalorder 1, %s23
      %p332 = scmp.lt.s32.totalorder %s23, 3
      %p333 = pnand %p331, %p332
      %p334 = pneg %p333
      // Predicated region
      $region49: #{tpu_custom_call.1} parent=5 // pred_check
        _
      $region50: #{tpu_custom_call.1} parent=5 // pred_check_branch
        %336 = sbr.rel (%p333) target = $region52
      $region51: #{tpu_custom_call.1} parent=5 // pred_region
        %s337 = ssub.s32 %s23, 1
        %s338 = sand.u32 %s76, 1
        %s339 = scalar_lea.sflag [#allocation6], %s338
        %s340 = sand.u32 %s76, 1
        %s341 = smul.addr %s340, 8
        %s342 = scalar_lea.vmem [#allocation5], %s341
        // Predicated region
        $region53: #{tpu_custom_call.1} parent=51 // pred_check
          %p343 = pneg %p89
        $region54: #{tpu_custom_call.1} parent=51 // pred_check_branch
          %345 = sbr.rel (%p343) target = $region56
        $region55: #{tpu_custom_call.1} parent=51 // pred_region
          %346 = dma.done %s339, 128
        $region56: #{tpu_custom_call.1} parent=51 // pred_fallthru
          _
        %s347 = sand.u32 %s102, 1
        %s348 = scalar_lea.sflag [#allocation9], %s347
        %s349 = sand.u32 %s102, 1
        %s350 = smul.addr %s349, 8
        %s351 = scalar_lea.vmem [#allocation8], %s350
        // Predicated region
        $region57: #{tpu_custom_call.1} parent=51 // pred_check
          %p352 = pneg %p115
        $region58: #{tpu_custom_call.1} parent=51 // pred_check_branch
          %354 = sbr.rel (%p352) target = $region60
        $region59: #{tpu_custom_call.1} parent=51 // pred_region
          %355 = dma.done %s348, 128
        $region60: #{tpu_custom_call.1} parent=51 // pred_fallthru
          _
        %s356 = smul.u32 2, %s33
        %p357 = scmp.lt.s32.totalorder %s32, 1
        %s358 = scalar_select %p357, %s32, 1
        %p359 = scmp.lt.s32.totalorder %s356, 1
        %s360 = scalar_select %p359, %s356, 1
        %s361 = smul.addr %s358, 2
        %s362 = sadd.s32 %s360, %s361
        %s363 = smul.addr %s362, 8
        %s364 = scalar_lea.vmem %s0, %s363
        %p365 = pneg %p63
        %p366 = pneg %p60
        %s367 = sand.u32 %s76, 1
        %s368 = scalar_lea.sflag [#allocation6], %s367
        %s369 = sand.u32 %s76, 1
        %s370 = smul.addr %s369, 8
        %s371 = scalar_lea.vmem [#allocation5], %s370
        %p372 = pneg %p89
        %p373 = pneg %p86
        %s374 = sand.u32 %s102, 1
        %s375 = scalar_lea.sflag [#allocation9], %s374
        %s376 = sand.u32 %s102, 1
        %s377 = smul.addr %s376, 8
        %s378 = scalar_lea.vmem [#allocation8], %s377
        %p379 = pneg %p115
        %p380 = pneg %p112
        %p381 = pneg %p136
        %p382 = pneg %p133
        %p383 = pneg %p157
        %p384 = pneg %p154
        %p385 = pneg %p178
        %p386 = pneg %p175
        %p387 = pneg %p199
        %p388 = pneg %p196
        %p389 = pneg %p220
        %p390 = pneg %p217
        %p391 = pneg %p248
        %p392 = pneg %p245
        %s393 = sand.u32 %s235, 1
        %s394 = scalar_lea.sflag [#allocation7], %s393
        %s395 = sand.u32 %s235, 1
        %s396 = smul.addr %s395, 16
        %s397 = scalar_lea.vmem [#allocation10], %s396
        %s398 = smul.u32 2, %s33
        %p399 = scmp.lt.s32.totalorder %s32, 1
        %s400 = scalar_select %p399, %s32, 1
        %p401 = scmp.lt.s32.totalorder %s398, 1
        %s402 = scalar_select %p401, %s398, 1
        %s403 = smul.addr %s400, 2
        %s404 = sadd.s32 %s402, %s403
        %s405 = smul.addr %s404, 8
        %s406 = scalar_lea.vmem %s0, %s405
        %s407 = smul.u32 2, %s33
        %s408 = smul.u32 2, %s33
        %p409 = scmp.eq.s32.totalorder %s33, 0
        // Predicated region
        $region61: #{tpu_custom_call.1} parent=51 // pred_check
          %p410 = pneg %p409
        $region62: #{tpu_custom_call.1} parent=51 // pred_check_branch
          %412 = sbr.rel (%p410) target = $region64
        $region63: #{tpu_custom_call.1} parent=51 // pred_region
          %v413 = vld [vmem:[%s342] sm:$0xff]
          %v414 = vld [vmem:[%s351] sm:$0xff]
          %v415 = vld [vmem:[%s4] sm:$0xff]
          %v416 = vld [vmem:[%s4 + $0x8] sm:$0xff]
          %v417 = vld [vmem:[%s4 + $0x10] sm:$0xff]
          %vm418 = vcmask 195584
          %v420 = vsel %vm418, %v413, 0
          %422 = vmatprep.subr.mxu0 0.0
          %423 = vmatpush1.msra.mxu0 %v415
          %424 = vmatprep.subr.mxu0 0.0
          %425 = vmatpush1.msra.mxu0 %v416
          %426 = vmatprep.subr.mxu0 0.0
          %427 = vmatpush1.msra.mxu0 %v417
          %428 = vmatprep.subr.mxu0 0.0
          %429 = vmatpush1.msra.mxu0 0.0
          %430 = vmatprep.subr.mxu0 0.0
          %431 = vmatpush1.msra.mxu0 0.0
          %432 = vmatprep.subr.mxu0 0.0
          %433 = vmatpush1.msra.mxu0 0.0
          %434 = vmatprep.subr.mxu0 0.0
          %435 = vmatpush1.msra.mxu0 0.0
          %436 = vmatprep.subr.mxu0 0.0
          %437 = vmatpush1.msra.mxu0 0.0
          %438 = vmatprep.subr.mxu0 0.0
          %439 = vmatpush1.msra.mxu0 0.0
          %440 = vmatprep.subr.mxu0 0.0
          %441 = vmatpush1.msra.mxu0 0.0
          %442 = vmatprep.subr.mxu0 0.0
          %443 = vmatpush1.msra.mxu0 0.0
          %444 = vmatprep.subr.mxu0 0.0
          %445 = vmatpush1.msra.mxu0 0.0
          %446 = vmatprep.subr.mxu0 0.0
          %447 = vmatpush1.msra.mxu0 0.0
          %448 = vmatprep.subr.mxu0 0.0
          %449 = vmatpush1.msra.mxu0 0.0
          %450 = vmatprep.subr.mxu0 0.0
          %451 = vmatpush1.msra.mxu0 0.0
          %452 = vmatprep.subr.mxu0 0.0
          %453 = vmatpush1.msra.mxu0 0.0
          %454 = vmatprep.subr.mxu0 0.0
          %455 = vmatpush1.msra.mxu0 0.0
          %456 = vmatprep.subr.mxu0 0.0
          %457 = vmatpush1.msra.mxu0 0.0
          %458 = vmatprep.subr.mxu0 0.0
          %459 = vmatpush1.msra.mxu0 0.0
          %460 = vmatprep.subr.mxu0 0.0
          %461 = vmatpush1.msra.mxu0 0.0
          %462 = vmatprep.subr.mxu0 0.0
          %463 = vmatpush1.msra.mxu0 0.0
          %464 = vmatprep.subr.mxu0 0.0
          %465 = vmatpush1.msra.mxu0 0.0
          %466 = vmatprep.subr.mxu0 0.0
          %467 = vmatpush1.msra.mxu0 0.0
          %468 = vmatprep.subr.mxu0 0.0
          %469 = vmatpush1.msra.mxu0 0.0
          %470 = vmatprep.subr.mxu0 0.0
          %471 = vmatpush1.msra.mxu0 0.0
          %472 = vmatprep.subr.mxu0 0.0
          %473 = vmatpush1.msra.mxu0 0.0
          %474 = vmatprep.subr.mxu0 0.0
          %475 = vmatpush1.msra.mxu0 0.0
          %476 = vmatprep.subr.mxu0 0.0
          %477 = vmatpush1.msra.mxu0 0.0
          %478 = vmatprep.subr.mxu0 0.0
          %479 = vmatpush1.msra.mxu0 0.0
          %480 = vmatprep.subr.mxu0 0.0
          %481 = vmatpush1.msra.mxu0 0.0
          %482 = vmatprep.subr.mxu0 0.0
          %483 = vmatpush1.msra.mxu0 0.0
          %484 = vmatprep.subr.mxu0 0.0
          %485 = vmatpush1.msra.mxu0 0.0
          %486 = vmatprep.mubr.f32.mxu0 0.0
          %487 = vmatmul.mubr.f32.gmra.mrb[0].mxu0 %v420
          %v488 = vpop.f32.mrb[0].mxu0
          %v489 = vadd.f32 0.0, %v488
          %v490 = vpop.f32.mrb[0].mxu0
          %491 = vdwg.mxu0
          %vm492 = vcmask 523264
          %493 = vst.msk [vmem:[#allocation2] sm:$0xff] %vm492, %v489
          %v494 = vld [vmem:[%s5] sm:$0xff]
          %v495 = vld [vmem:[%s5 + $0x8] sm:$0xff]
          %v496 = vld [vmem:[%s5 + $0x10] sm:$0xff]
          %v498 = vsel %vm418, %v414, 0
          %500 = vmatprep.subr.mxu0 0.0
          %501 = vmatpush1.msra.mxu0 %v494
          %502 = vmatprep.subr.mxu0 0.0
          %503 = vmatpush1.msra.mxu0 %v495
          %504 = vmatprep.subr.mxu0 0.0
          %505 = vmatpush1.msra.mxu0 %v496
          %506 = vmatprep.subr.mxu0 0.0
          %507 = vmatpush1.msra.mxu0 0.0
          %508 = vmatprep.subr.mxu0 0.0
          %509 = vmatpush1.msra.mxu0 0.0
          %510 = vmatprep.subr.mxu0 0.0
          %511 = vmatpush1.msra.mxu0 0.0
          %512 = vmatprep.subr.mxu0 0.0
          %513 = vmatpush1.msra.mxu0 0.0
          %514 = vmatprep.subr.mxu0 0.0
          %515 = vmatpush1.msra.mxu0 0.0
          %516 = vmatprep.subr.mxu0 0.0
          %517 = vmatpush1.msra.mxu0 0.0
          %518 = vmatprep.subr.mxu0 0.0
          %519 = vmatpush1.msra.mxu0 0.0
          %520 = vmatprep.subr.mxu0 0.0
          %521 = vmatpush1.msra.mxu0 0.0
          %522 = vmatprep.subr.mxu0 0.0
          %523 = vmatpush1.msra.mxu0 0.0
          %524 = vmatprep.subr.mxu0 0.0
          %525 = vmatpush1.msra.mxu0 0.0
          %526 = vmatprep.subr.mxu0 0.0
          %527 = vmatpush1.msra.mxu0 0.0
          %528 = vmatprep.subr.mxu0 0.0
          %529 = vmatpush1.msra.mxu0 0.0
          %530 = vmatprep.subr.mxu0 0.0
          %531 = vmatpush1.msra.mxu0 0.0
          %532 = vmatprep.subr.mxu0 0.0
          %533 = vmatpush1.msra.mxu0 0.0
          %534 = vmatprep.subr.mxu0 0.0
          %535 = vmatpush1.msra.mxu0 0.0
          %536 = vmatprep.subr.mxu0 0.0
          %537 = vmatpush1.msra.mxu0 0.0
          %538 = vmatprep.subr.mxu0 0.0
          %539 = vmatpush1.msra.mxu0 0.0
          %540 = vmatprep.subr.mxu0 0.0
          %541 = vmatpush1.msra.mxu0 0.0
          %542 = vmatprep.subr.mxu0 0.0
          %543 = vmatpush1.msra.mxu0 0.0
          %544 = vmatprep.subr.mxu0 0.0
          %545 = vmatpush1.msra.mxu0 0.0
          %546 = vmatprep.subr.mxu0 0.0
          %547 = vmatpush1.msra.mxu0 0.0
          %548 = vmatprep.subr.mxu0 0.0
          %549 = vmatpush1.msra.mxu0 0.0
          %550 = vmatprep.subr.mxu0 0.0
          %551 = vmatpush1.msra.mxu0 0.0
          %552 = vmatprep.subr.mxu0 0.0
          %553 = vmatpush1.msra.mxu0 0.0
          %554 = vmatprep.subr.mxu0 0.0
          %555 = vmatpush1.msra.mxu0 0.0
          %556 = vmatprep.subr.mxu0 0.0
          %557 = vmatpush1.msra.mxu0 0.0
          %558 = vmatprep.subr.mxu0 0.0
          %559 = vmatpush1.msra.mxu0 0.0
          %560 = vmatprep.subr.mxu0 0.0
          %561 = vmatpush1.msra.mxu0 0.0
          %562 = vmatprep.subr.mxu0 0.0
          %563 = vmatpush1.msra.mxu0 0.0
          %564 = vmatprep.mubr.f32.mxu0 0.0
          %565 = vmatmul.mubr.f32.gmra.mrb[0].mxu0 %v498
          %v566 = vpop.f32.mrb[0].mxu0
          %v567 = vadd.f32 0.0, %v566
          %v568 = vpop.f32.mrb[0].mxu0
          %569 = vdwg.mxu0
          %570 = vst.msk [vmem:[#allocation3] sm:$0xff] %vm492, %v567
        $region64: #{tpu_custom_call.1} parent=51 // pred_fallthru
          _
        %v571 = vld [vmem:[%s406] sm:$0xff]
        %v572 = vld [vmem:[%s406 + $0x8] sm:$0xff]
        %v573 = vld [vmem:[%s3] sm:$0xff]
        %v574 = vld [vmem:[%s3 + $0x8] sm:$0xff]
        %v575 = vld [vmem:[%s3 + $0x10] sm:$0xff]
        %v576 = vld [vmem:[%s3 + $0x18] sm:$0xff]
        %vm577 = vcmask 261120
        %v579 = vsel %vm577, %v571, 0
        %v582 = vsel %vm577, %v572, 0
        %584 = vmatprep.subr.mxu0 0.0
        %585 = vmatpush1.msra.mxu0 %v573
        %586 = vmatprep.subr.mxu0 0.0
        %587 = vmatpush1.msra.mxu0 %v574
        %588 = vmatprep.subr.mxu0 0.0
        %589 = vmatpush1.msra.mxu0 %v575
        %590 = vmatprep.subr.mxu0 0.0
        %591 = vmatpush1.msra.mxu0 %v576
        %592 = vmatprep.subr.mxu0 0.0
        %593 = vmatpush1.msra.mxu0 0.0
        %594 = vmatprep.subr.mxu0 0.0
        %595 = vmatpush1.msra.mxu0 0.0
        %596 = vmatprep.subr.mxu0 0.0
        %597 = vmatpush1.msra.mxu0 0.0
        %598 = vmatprep.subr.mxu0 0.0
        %599 = vmatpush1.msra.mxu0 0.0
        %600 = vmatprep.subr.mxu0 0.0
        %601 = vmatpush1.msra.mxu0 0.0
        %602 = vmatprep.subr.mxu0 0.0
        %603 = vmatpush1.msra.mxu0 0.0
        %604 = vmatprep.subr.mxu0 0.0
        %605 = vmatpush1.msra.mxu0 0.0
        %606 = vmatprep.subr.mxu0 0.0
        %607 = vmatpush1.msra.mxu0 0.0
        %608 = vmatprep.subr.mxu0 0.0
        %609 = vmatpush1.msra.mxu0 0.0
        %610 = vmatprep.subr.mxu0 0.0
        %611 = vmatpush1.msra.mxu0 0.0
        %612 = vmatprep.subr.mxu0 0.0
        %613 = vmatpush1.msra.mxu0 0.0
        %614 = vmatprep.subr.mxu0 0.0
        %615 = vmatpush1.msra.mxu0 0.0
        %616 = vmatprep.subr.mxu0 0.0
        %617 = vmatpush1.msra.mxu0 0.0
        %618 = vmatprep.subr.mxu0 0.0
        %619 = vmatpush1.msra.mxu0 0.0
        %620 = vmatprep.subr.mxu0 0.0
        %621 = vmatpush1.msra.mxu0 0.0
        %622 = vmatprep.subr.mxu0 0.0
        %623 = vmatpush1.msra.mxu0 0.0
        %624 = vmatprep.subr.mxu0 0.0
        %625 = vmatpush1.msra.mxu0 0.0
        %626 = vmatprep.subr.mxu0 0.0
        %627 = vmatpush1.msra.mxu0 0.0
        %628 = vmatprep.subr.mxu0 0.0
        %629 = vmatpush1.msra.mxu0 0.0
        %630 = vmatprep.subr.mxu0 0.0
        %631 = vmatpush1.msra.mxu0 0.0
        %632 = vmatprep.subr.mxu0 0.0
        %633 = vmatpush1.msra.mxu0 0.0
        %634 = vmatprep.subr.mxu0 0.0
        %635 = vmatpush1.msra.mxu0 0.0
        %636 = vmatprep.subr.mxu0 0.0
        %637 = vmatpush1.msra.mxu0 0.0
        %638 = vmatprep.subr.mxu0 0.0
        %639 = vmatpush1.msra.mxu0 0.0
        %640 = vmatprep.subr.mxu0 0.0
        %641 = vmatpush1.msra.mxu0 0.0
        %642 = vmatprep.subr.mxu0 0.0
        %643 = vmatpush1.msra.mxu0 0.0
        %644 = vmatprep.subr.mxu0 0.0
        %645 = vmatpush1.msra.mxu0 0.0
        %646 = vmatprep.subr.mxu0 0.0
        %647 = vmatpush1.msra.mxu0 0.0
        %648 = vmatprep.mubr.f32.mxu0 0.0
        %649 = vmatmul.mubr.f32.gmra.mrb[0].mxu0 %v579
        %v650 = vpop.f32.mrb[0].mxu0
        %v651 = vadd.f32 0.0, %v650
        %v652 = vpop.f32.mrb[0].mxu0
        %653 = vmatprep.mubr.f32.mxu0 0.0
        %654 = vmatmul.mubr.f32.gmra.mrb[0].mxu0 %v582
        %v655 = vpop.f32.mrb[0].mxu0
        %v656 = vadd.f32 0.0, %v655
        %v657 = vpop.f32.mrb[0].mxu0
        %658 = vdwg.mxu0
        %v659 = vld [vmem:[#allocation2] sm:$0xff]
        %v660 = vld [vmem:[#allocation3] sm:$0xff]
        %vm661 = vcmask 130048
        %v663 = vsel %vm661, %v651, 0
        %v666 = vsel %vm661, %v656, 0
        %v669 = vsel %vm661, %v659, 0
        %671 = vmatprep.subr.mxu0 0.0
        %672 = vmatpush1.xpose.msra.mxu0 %v669
        %673 = vmatprep.subr.mxu0 0.0
        %674 = vmatpush1.xpose.msra.mxu0 0.0
        %675 = vmatprep.subr.mxu0 0.0
        %676 = vmatpush1.xpose.msra.mxu0 0.0
        %677 = vmatprep.subr.mxu0 0.0
        %678 = vmatpush1.xpose.msra.mxu0 0.0
        %679 = vmatprep.subr.mxu0 0.0
        %680 = vmatpush1.xpose.msra.mxu0 0.0
        %681 = vmatprep.subr.mxu0 0.0
        %682 = vmatpush1.xpose.msra.mxu0 0.0
        %683 = vmatprep.subr.mxu0 0.0
        %684 = vmatpush1.xpose.msra.mxu0 0.0
        %685 = vmatprep.subr.mxu0 0.0
        %686 = vmatpush1.xpose.msra.mxu0 0.0
        %687 = vmatprep.subr.mxu0 0.0
        %688 = vmatpush1.xpose.msra.mxu0 0.0
        %689 = vmatprep.subr.mxu0 0.0
        %690 = vmatpush1.xpose.msra.mxu0 0.0
        %691 = vmatprep.subr.mxu0 0.0
        %692 = vmatpush1.xpose.msra.mxu0 0.0
        %693 = vmatprep.subr.mxu0 0.0
        %694 = vmatpush1.xpose.msra.mxu0 0.0
        %695 = vmatprep.subr.mxu0 0.0
        %696 = vmatpush1.xpose.msra.mxu0 0.0
        %697 = vmatprep.subr.mxu0 0.0
        %698 = vmatpush1.xpose.msra.mxu0 0.0
        %699 = vmatprep.subr.mxu0 0.0
        %700 = vmatpush1.xpose.msra.mxu0 0.0
        %701 = vmatprep.subr.mxu0 0.0
        %702 = vmatpush1.xpose.msra.mxu0 0.0
        %703 = vmatprep.subr.mxu0 0.0
        %704 = vmatpush1.xpose.msra.mxu0 0.0
        %705 = vmatprep.subr.mxu0 0.0
        %706 = vmatpush1.xpose.msra.mxu0 0.0
        %707 = vmatprep.subr.mxu0 0.0
        %708 = vmatpush1.xpose.msra.mxu0 0.0
        %709 = vmatprep.subr.mxu0 0.0
        %710 = vmatpush1.xpose.msra.mxu0 0.0
        %711 = vmatprep.subr.mxu0 0.0
        %712 = vmatpush1.xpose.msra.mxu0 0.0
        %713 = vmatprep.subr.mxu0 0.0
        %714 = vmatpush1.xpose.msra.mxu0 0.0
        %715 = vmatprep.subr.mxu0 0.0
        %716 = vmatpush1.xpose.msra.mxu0 0.0
        %717 = vmatprep.subr.mxu0 0.0
        %718 = vmatpush1.xpose.msra.mxu0 0.0
        %719 = vmatprep.subr.mxu0 0.0
        %720 = vmatpush1.xpose.msra.mxu0 0.0
        %721 = vmatprep.subr.mxu0 0.0
        %722 = vmatpush1.xpose.msra.mxu0 0.0
        %723 = vmatprep.subr.mxu0 0.0
        %724 = vmatpush1.xpose.msra.mxu0 0.0
        %725 = vmatprep.subr.mxu0 0.0
        %726 = vmatpush1.xpose.msra.mxu0 0.0
        %727 = vmatprep.subr.mxu0 0.0
        %728 = vmatpush1.xpose.msra.mxu0 0.0
        %729 = vmatprep.subr.mxu0 0.0
        %730 = vmatpush1.xpose.msra.mxu0 0.0
        %731 = vmatprep.subr.mxu0 0.0
        %732 = vmatpush1.xpose.msra.mxu0 0.0
        %733 = vmatprep.subr.mxu0 0.0
        %734 = vmatpush1.xpose.msra.mxu0 0.0
        %735 = vmatprep.mubr.f32.mxu0 0.0
        %736 = vmatmul.mubr.f32.gmra.mrb[0].mxu0 %v663
        %v737 = vpop.f32.mrb[0].mxu0
        %v738 = vadd.f32 0.0, %v737
        %v739 = vpop.f32.mrb[0].mxu0
        %740 = vmatprep.mubr.f32.mxu0 0.0
        %741 = vmatmul.mubr.f32.gmra.mrb[0].mxu0 %v666
        %v742 = vpop.f32.mrb[0].mxu0
        %v743 = vadd.f32 0.0, %v742
        %v744 = vpop.f32.mrb[0].mxu0
        %745 = vdwg.mxu0
        %vm746 = vcmask 64512
        %v747 = vsel %vm746, %v738, -inf
        %748 = vmax.xlane.f32.xlu0 %v747
        %v749 = vpop.xlane.xlu0 %748
        %v750 = vsel %vm746, %v743, -inf
        %751 = vmax.xlane.f32.xlu0 %v750
        %v752 = vpop.xlane.xlu0 %751
        %v753 = vsub.f32 %v738, %v749
        %v754 = vsub.f32 %v743, %v752
        %v755 = vmul.f32 %v753, 1.442695
        %v756 = vpow.pop %v755
        %v757 = vmul.f32 %v754, 1.442695
        %v758 = vpow.pop %v757
        %v759 = vsel %vm746, %v756, 0.0
        %760 = vadd.xlane.f32.xlu0 %v759
        %v761 = vpop.xlane.xlu0 %760
        %v762 = vsel %vm746, %v758, 0.0
        %763 = vadd.xlane.f32.xlu0 %v762
        %v764 = vpop.xlane.xlu0 %763
        %v766 = vsel %vm746, %v756, 0
        %v769 = vsel %vm746, %v758, 0
        %771 = vmatprep.subr.mxu0 0.0
        %772 = vmatpush1.msra.mxu0 %v660
        %773 = vmatprep.subr.mxu0 0.0
        %774 = vmatpush1.msra.mxu0 0.0
        %775 = vmatprep.subr.mxu0 0.0
        %776 = vmatpush1.msra.mxu0 0.0
        %777 = vmatprep.subr.mxu0 0.0
        %778 = vmatpush1.msra.mxu0 0.0
        %779 = vmatprep.subr.mxu0 0.0
        %780 = vmatpush1.msra.mxu0 0.0
        %781 = vmatprep.subr.mxu0 0.0
        %782 = vmatpush1.msra.mxu0 0.0
        %783 = vmatprep.subr.mxu0 0.0
        %784 = vmatpush1.msra.mxu0 0.0
        %785 = vmatprep.subr.mxu0 0.0
        %786 = vmatpush1.msra.mxu0 0.0
        %787 = vmatprep.subr.mxu0 0.0
        %788 = vmatpush1.msra.mxu0 0.0
        %789 = vmatprep.subr.mxu0 0.0
        %790 = vmatpush1.msra.mxu0 0.0
        %791 = vmatprep.subr.mxu0 0.0
        %792 = vmatpush1.msra.mxu0 0.0
        %793 = vmatprep.subr.mxu0 0.0
        %794 = vmatpush1.msra.mxu0 0.0
        %795 = vmatprep.subr.mxu0 0.0
        %796 = vmatpush1.msra.mxu0 0.0
        %797 = vmatprep.subr.mxu0 0.0
        %798 = vmatpush1.msra.mxu0 0.0
        %799 = vmatprep.subr.mxu0 0.0
        %800 = vmatpush1.msra.mxu0 0.0
        %801 = vmatprep.subr.mxu0 0.0
        %802 = vmatpush1.msra.mxu0 0.0
        %803 = vmatprep.subr.mxu0 0.0
        %804 = vmatpush1.msra.mxu0 0.0
        %805 = vmatprep.subr.mxu0 0.0
        %806 = vmatpush1.msra.mxu0 0.0
        %807 = vmatprep.subr.mxu0 0.0
        %808 = vmatpush1.msra.mxu0 0.0
        %809 = vmatprep.subr.mxu0 0.0
        %810 = vmatpush1.msra.mxu0 0.0
        %811 = vmatprep.subr.mxu0 0.0
        %812 = vmatpush1.msra.mxu0 0.0
        %813 = vmatprep.subr.mxu0 0.0
        %814 = vmatpush1.msra.mxu0 0.0
        %815 = vmatprep.subr.mxu0 0.0
        %816 = vmatpush1.msra.mxu0 0.0
        %817 = vmatprep.subr.mxu0 0.0
        %818 = vmatpush1.msra.mxu0 0.0
        %819 = vmatprep.subr.mxu0 0.0
        %820 = vmatpush1.msra.mxu0 0.0
        %821 = vmatprep.subr.mxu0 0.0
        %822 = vmatpush1.msra.mxu0 0.0
        %823 = vmatprep.subr.mxu0 0.0
        %824 = vmatpush1.msra.mxu0 0.0
        %825 = vmatprep.subr.mxu0 0.0
        %826 = vmatpush1.msra.mxu0 0.0
        %827 = vmatprep.subr.mxu0 0.0
        %828 = vmatpush1.msra.mxu0 0.0
        %829 = vmatprep.subr.mxu0 0.0
        %830 = vmatpush1.msra.mxu0 0.0
        %831 = vmatprep.subr.mxu0 0.0
        %832 = vmatpush1.msra.mxu0 0.0
        %833 = vmatprep.subr.mxu0 0.0
        %834 = vmatpush1.msra.mxu0 0.0
        %835 = vmatprep.mubr.f32.mxu0 0.0
        %836 = vmatmul.mubr.f32.gmra.mrb[0].mxu0 %v766
        %v837 = vpop.f32.mrb[0].mxu0
        %v838 = vadd.f32 0.0, %v837
        %v839 = vpop.f32.mrb[0].mxu0
        %840 = vmatprep.mubr.f32.mxu0 0.0
        %841 = vmatmul.mubr.f32.gmra.mrb[0].mxu0 %v769
        %v842 = vpop.f32.mrb[0].mxu0
        %v843 = vadd.f32 0.0, %v842
        %v844 = vpop.f32.mrb[0].mxu0
        %845 = vdwg.mxu0
        %v846 = vrcp.pop %v761
        %v847 = vmul.f32 %v838, %v846
        %v848 = vrcp.pop %v764
        %v849 = vmul.f32 %v843, %v848
        %850 = vst.msk [vmem:[#allocation4] sm:$0xff] %vm661, %v847
        %851 = vst.msk [vmem:[#allocation4 + $0x8] sm:$0xff] %vm661, %v849
        %v852 = vld [vmem:[#allocation2] sm:$0xff]
        %v853 = vld [vmem:[#allocation3] sm:$0xff]
        %854 = vrot.lane.b32.xlu0 %v651, 112
        %v855 = vpop.permute.xlu0 %854
        %856 = vrot.lane.b32.xlu0 %v656, 112
        %v857 = vpop.permute.xlu0 %856
        %859 = vrot.lane.b32.xlu0 %v852, 112
        %v860 = vpop.permute.xlu0 %859
        %v861 = vsel %vm661, %v855, 0
        %v863 = vsel %vm661, %v857, 0
        %v865 = vsel %vm661, %v860, 0
        %867 = vmatprep.subr.mxu0 0.0
        %868 = vmatpush1.xpose.msra.mxu0 %v865
        %869 = vmatprep.subr.mxu0 0.0
        %870 = vmatpush1.xpose.msra.mxu0 0.0
        %871 = vmatprep.subr.mxu0 0.0
        %872 = vmatpush1.xpose.msra.mxu0 0.0
        %873 = vmatprep.subr.mxu0 0.0
        %874 = vmatpush1.xpose.msra.mxu0 0.0
        %875 = vmatprep.subr.mxu0 0.0
        %876 = vmatpush1.xpose.msra.mxu0 0.0
        %877 = vmatprep.subr.mxu0 0.0
        %878 = vmatpush1.xpose.msra.mxu0 0.0
        %879 = vmatprep.subr.mxu0 0.0
        %880 = vmatpush1.xpose.msra.mxu0 0.0
        %881 = vmatprep.subr.mxu0 0.0
        %882 = vmatpush1.xpose.msra.mxu0 0.0
        %883 = vmatprep.subr.mxu0 0.0
        %884 = vmatpush1.xpose.msra.mxu0 0.0
        %885 = vmatprep.subr.mxu0 0.0
        %886 = vmatpush1.xpose.msra.mxu0 0.0
        %887 = vmatprep.subr.mxu0 0.0
        %888 = vmatpush1.xpose.msra.mxu0 0.0
        %889 = vmatprep.subr.mxu0 0.0
        %890 = vmatpush1.xpose.msra.mxu0 0.0
        %891 = vmatprep.subr.mxu0 0.0
        %892 = vmatpush1.xpose.msra.mxu0 0.0
        %893 = vmatprep.subr.mxu0 0.0
        %894 = vmatpush1.xpose.msra.mxu0 0.0
        %895 = vmatprep.subr.mxu0 0.0
        %896 = vmatpush1.xpose.msra.mxu0 0.0
        %897 = vmatprep.subr.mxu0 0.0
        %898 = vmatpush1.xpose.msra.mxu0 0.0
        %899 = vmatprep.subr.mxu0 0.0
        %900 = vmatpush1.xpose.msra.mxu0 0.0
        %901 = vmatprep.subr.mxu0 0.0
        %902 = vmatpush1.xpose.msra.mxu0 0.0
        %903 = vmatprep.subr.mxu0 0.0
        %904 = vmatpush1.xpose.msra.mxu0 0.0
        %905 = vmatprep.subr.mxu0 0.0
        %906 = vmatpush1.xpose.msra.mxu0 0.0
        %907 = vmatprep.subr.mxu0 0.0
        %908 = vmatpush1.xpose.msra.mxu0 0.0
        %909 = vmatprep.subr.mxu0 0.0
        %910 = vmatpush1.xpose.msra.mxu0 0.0
        %911 = vmatprep.subr.mxu0 0.0
        %912 = vmatpush1.xpose.msra.mxu0 0.0
        %913 = vmatprep.subr.mxu0 0.0
        %914 = vmatpush1.xpose.msra.mxu0 0.0
        %915 = vmatprep.subr.mxu0 0.0
        %916 = vmatpush1.xpose.msra.mxu0 0.0
        %917 = vmatprep.subr.mxu0 0.0
        %918 = vmatpush1.xpose.msra.mxu0 0.0
        %919 = vmatprep.subr.mxu0 0.0
        %920 = vmatpush1.xpose.msra.mxu0 0.0
        %921 = vmatprep.subr.mxu0 0.0
        %922 = vmatpush1.xpose.msra.mxu0 0.0
        %923 = vmatprep.subr.mxu0 0.0
        %924 = vmatpush1.xpose.msra.mxu0 0.0
        %925 = vmatprep.subr.mxu0 0.0
        %926 = vmatpush1.xpose.msra.mxu0 0.0
        %927 = vmatprep.subr.mxu0 0.0
        %928 = vmatpush1.xpose.msra.mxu0 0.0
        %929 = vmatprep.subr.mxu0 0.0
        %930 = vmatpush1.xpose.msra.mxu0 0.0
        %931 = vmatprep.mubr.f32.mxu0 0.0
        %932 = vmatmul.mubr.f32.gmra.mrb[0].mxu0 %v861
        %v933 = vpop.f32.mrb[0].mxu0
        %v934 = vadd.f32 0.0, %v933
        %v935 = vpop.f32.mrb[0].mxu0
        %936 = vmatprep.mubr.f32.mxu0 0.0
        %937 = vmatmul.mubr.f32.gmra.mrb[0].mxu0 %v863
        %v938 = vpop.f32.mrb[0].mxu0
        %v939 = vadd.f32 0.0, %v938
        %v940 = vpop.f32.mrb[0].mxu0
        %941 = vdwg.mxu0
        %v942 = vsel %vm746, %v934, -inf
        %943 = vmax.xlane.f32.xlu0 %v942
        %v944 = vpop.xlane.xlu0 %943
        %v945 = vsel %vm746, %v939, -inf
        %946 = vmax.xlane.f32.xlu0 %v945
        %v947 = vpop.xlane.xlu0 %946
        %v948 = vsub.f32 %v934, %v944
        %v949 = vsub.f32 %v939, %v947
        %v950 = vmul.f32 %v948, 1.442695
        %v951 = vpow.pop %v950
        %v952 = vmul.f32 %v949, 1.442695
        %v953 = vpow.pop %v952
        %v954 = vsel %vm746, %v951, 0.0
        %955 = vadd.xlane.f32.xlu0 %v954
        %v956 = vpop.xlane.xlu0 %955
        %v957 = vsel %vm746, %v953, 0.0
        %958 = vadd.xlane.f32.xlu0 %v957
        %v959 = vpop.xlane.xlu0 %958
        %961 = vrot.lane.b32.xlu0 %v853, 112
        %v962 = vpop.permute.xlu0 %961
        %v965 = vsel %vm746, %v951, 0
        %v968 = vsel %vm746, %v953, 0
        %970 = vmatprep.subr.mxu0 0.0
        %971 = vmatpush1.msra.mxu0 %v962
        %972 = vmatprep.subr.mxu0 0.0
        %973 = vmatpush1.msra.mxu0 0.0
        %974 = vmatprep.subr.mxu0 0.0
        %975 = vmatpush1.msra.mxu0 0.0
        %976 = vmatprep.subr.mxu0 0.0
        %977 = vmatpush1.msra.mxu0 0.0
        %978 = vmatprep.subr.mxu0 0.0
        %979 = vmatpush1.msra.mxu0 0.0
        %980 = vmatprep.subr.mxu0 0.0
        %981 = vmatpush1.msra.mxu0 0.0
        %982 = vmatprep.subr.mxu0 0.0
        %983 = vmatpush1.msra.mxu0 0.0
        %984 = vmatprep.subr.mxu0 0.0
        %985 = vmatpush1.msra.mxu0 0.0
        %986 = vmatprep.subr.mxu0 0.0
        %987 = vmatpush1.msra.mxu0 0.0
        %988 = vmatprep.subr.mxu0 0.0
        %989 = vmatpush1.msra.mxu0 0.0
        %990 = vmatprep.subr.mxu0 0.0
        %991 = vmatpush1.msra.mxu0 0.0
        %992 = vmatprep.subr.mxu0 0.0
        %993 = vmatpush1.msra.mxu0 0.0
        %994 = vmatprep.subr.mxu0 0.0
        %995 = vmatpush1.msra.mxu0 0.0
        %996 = vmatprep.subr.mxu0 0.0
        %997 = vmatpush1.msra.mxu0 0.0
        %998 = vmatprep.subr.mxu0 0.0
        %999 = vmatpush1.msra.mxu0 0.0
        %1000 = vmatprep.subr.mxu0 0.0
        %1001 = vmatpush1.msra.mxu0 0.0
        %1002 = vmatprep.subr.mxu0 0.0
        %1003 = vmatpush1.msra.mxu0 0.0
        %1004 = vmatprep.subr.mxu0 0.0
        %1005 = vmatpush1.msra.mxu0 0.0
        %1006 = vmatprep.subr.mxu0 0.0
        %1007 = vmatpush1.msra.mxu0 0.0
        %1008 = vmatprep.subr.mxu0 0.0
        %1009 = vmatpush1.msra.mxu0 0.0
        %1010 = vmatprep.subr.mxu0 0.0
        %1011 = vmatpush1.msra.mxu0 0.0
        %1012 = vmatprep.subr.mxu0 0.0
        %1013 = vmatpush1.msra.mxu0 0.0
        %1014 = vmatprep.subr.mxu0 0.0
        %1015 = vmatpush1.msra.mxu0 0.0
        %1016 = vmatprep.subr.mxu0 0.0
        %1017 = vmatpush1.msra.mxu0 0.0
        %1018 = vmatprep.subr.mxu0 0.0
        %1019 = vmatpush1.msra.mxu0 0.0
        %1020 = vmatprep.subr.mxu0 0.0
        %1021 = vmatpush1.msra.mxu0 0.0
        %1022 = vmatprep.subr.mxu0 0.0
        %1023 = vmatpush1.msra.mxu0 0.0
        %1024 = vmatprep.subr.mxu0 0.0
        %1025 = vmatpush1.msra.mxu0 0.0
        %1026 = vmatprep.subr.mxu0 0.0
        %1027 = vmatpush1.msra.mxu0 0.0
        %1028 = vmatprep.subr.mxu0 0.0
        %1029 = vmatpush1.msra.mxu0 0.0
        %1030 = vmatprep.subr.mxu0 0.0
        %1031 = vmatpush1.msra.mxu0 0.0
        %1032 = vmatprep.subr.mxu0 0.0
        %1033 = vmatpush1.msra.mxu0 0.0
        %1034 = vmatprep.mubr.f32.mxu0 0.0
        %1035 = vmatmul.mubr.f32.gmra.mrb[0].mxu0 %v965
        %v1036 = vpop.f32.mrb[0].mxu0
        %v1037 = vadd.f32 0.0, %v1036
        %v1038 = vpop.f32.mrb[0].mxu0
        %1039 = vmatprep.mubr.f32.mxu0 0.0
        %1040 = vmatmul.mubr.f32.gmra.mrb[0].mxu0 %v968
        %v1041 = vpop.f32.mrb[0].mxu0
        %v1042 = vadd.f32 0.0, %v1041
        %v1043 = vpop.f32.mrb[0].mxu0
        %1044 = vdwg.mxu0
        %v1045 = vrcp.pop %v956
        %v1046 = vmul.f32 %v1037, %v1045
        %v1047 = vrcp.pop %v959
        %v1048 = vmul.f32 %v1042, %v1047
        %1051 = vrot.lane.b32.xlu0 %v1046, 16
        %v1052 = vpop.permute.xlu0 %1051
        %1053 = vrot.lane.b32.xlu0 %v1048, 16
        %v1054 = vpop.permute.xlu0 %1053
        %vm1057 = vcmask 261248
        %1058 = vst.msk [vmem:[#allocation4] sm:$0xff] %vm1057, %v1052
        %1059 = vst.msk [vmem:[#allocation4 + $0x8] sm:$0xff] %vm1057, %v1054
        %v1060 = vld [vmem:[#allocation2] sm:$0xff]
        %v1061 = vld [vmem:[#allocation3] sm:$0xff]
        %1062 = vrot.lane.b32.xlu0 %v651, 96
        %v1063 = vpop.permute.xlu0 %1062
        %1064 = vrot.lane.b32.xlu0 %v656, 96
        %v1065 = vpop.permute.xlu0 %1064
        %1067 = vrot.lane.b32.xlu0 %v1060, 96
        %v1068 = vpop.permute.xlu0 %1067
        %v1069 = vsel %vm661, %v1063, 0
        %v1071 = vsel %vm661, %v1065, 0
        %v1073 = vsel %vm661, %v1068, 0
        %1075 = vmatprep.subr.mxu0 0.0
        %1076 = vmatpush1.xpose.msra.mxu0 %v1073
        %1077 = vmatprep.subr.mxu0 0.0
        %1078 = vmatpush1.xpose.msra.mxu0 0.0
        %1079 = vmatprep.subr.mxu0 0.0
        %1080 = vmatpush1.xpose.msra.mxu0 0.0
        %1081 = vmatprep.subr.mxu0 0.0
        %1082 = vmatpush1.xpose.msra.mxu0 0.0
        %1083 = vmatprep.subr.mxu0 0.0
        %1084 = vmatpush1.xpose.msra.mxu0 0.0
        %1085 = vmatprep.subr.mxu0 0.0
        %1086 = vmatpush1.xpose.msra.mxu0 0.0
        %1087 = vmatprep.subr.mxu0 0.0
        %1088 = vmatpush1.xpose.msra.mxu0 0.0
        %1089 = vmatprep.subr.mxu0 0.0
        %1090 = vmatpush1.xpose.msra.mxu0 0.0
        %1091 = vmatprep.subr.mxu0 0.0
        %1092 = vmatpush1.xpose.msra.mxu0 0.0
        %1093 = vmatprep.subr.mxu0 0.0
        %1094 = vmatpush1.xpose.msra.mxu0 0.0
        %1095 = vmatprep.subr.mxu0 0.0
        %1096 = vmatpush1.xpose.msra.mxu0 0.0
        %1097 = vmatprep.subr.mxu0 0.0
        %1098 = vmatpush1.xpose.msra.mxu0 0.0
        %1099 = vmatprep.subr.mxu0 0.0
        %1100 = vmatpush1.xpose.msra.mxu0 0.0
        %1101 = vmatprep.subr.mxu0 0.0
        %1102 = vmatpush1.xpose.msra.mxu0 0.0
        %1103 = vmatprep.subr.mxu0 0.0
        %1104 = vmatpush1.xpose.msra.mxu0 0.0
        %1105 = vmatprep.subr.mxu0 0.0
        %1106 = vmatpush1.xpose.msra.mxu0 0.0
        %1107 = vmatprep.subr.mxu0 0.0
        %1108 = vmatpush1.xpose.msra.mxu0 0.0
        %1109 = vmatprep.subr.mxu0 0.0
        %1110 = vmatpush1.xpose.msra.mxu0 0.0
        %1111 = vmatprep.subr.mxu0 0.0
        %1112 = vmatpush1.xpose.msra.mxu0 0.0
        %1113 = vmatprep.subr.mxu0 0.0
        %1114 = vmatpush1.xpose.msra.mxu0 0.0
        %1115 = vmatprep.subr.mxu0 0.0
        %1116 = vmatpush1.xpose.msra.mxu0 0.0
        %1117 = vmatprep.subr.mxu0 0.0
        %1118 = vmatpush1.xpose.msra.mxu0 0.0
        %1119 = vmatprep.subr.mxu0 0.0
        %1120 = vmatpush1.xpose.msra.mxu0 0.0
        %1121 = vmatprep.subr.mxu0 0.0
        %1122 = vmatpush1.xpose.msra.mxu0 0.0
        %1123 = vmatprep.subr.mxu0 0.0
        %1124 = vmatpush1.xpose.msra.mxu0 0.0
        %1125 = vmatprep.subr.mxu0 0.0
        %1126 = vmatpush1.xpose.msra.mxu0 0.0
        %1127 = vmatprep.subr.mxu0 0.0
        %1128 = vmatpush1.xpose.msra.mxu0 0.0
        %1129 = vmatprep.subr.mxu0 0.0
        %1130 = vmatpush1.xpose.msra.mxu0 0.0
        %1131 = vmatprep.subr.mxu0 0.0
        %1132 = vmatpush1.xpose.msra.mxu0 0.0
        %1133 = vmatprep.subr.mxu0 0.0
        %1134 = vmatpush1.xpose.msra.mxu0 0.0
        %1135 = vmatprep.subr.mxu0 0.0
        %1136 = vmatpush1.xpose.msra.mxu0 0.0
        %1137 = vmatprep.subr.mxu0 0.0
        %1138 = vmatpush1.xpose.msra.mxu0 0.0
        %1139 = vmatprep.mubr.f32.mxu0 0.0
        %1140 = vmatmul.mubr.f32.gmra.mrb[0].mxu0 %v1069
        %v1141 = vpop.f32.mrb[0].mxu0
        %v1142 = vadd.f32 0.0, %v1141
        %v1143 = vpop.f32.mrb[0].mxu0
        %1144 = vmatprep.mubr.f32.mxu0 0.0
        %1145 = vmatmul.mubr.f32.gmra.mrb[0].mxu0 %v1071
        %v1146 = vpop.f32.mrb[0].mxu0
        %v1147 = vadd.f32 0.0, %v1146
        %v1148 = vpop.f32.mrb[0].mxu0
        %1149 = vdwg.mxu0
        %v1150 = vsel %vm746, %v1142, -inf
        %1151 = vmax.xlane.f32.xlu0 %v1150
        %v1152 = vpop.xlane.xlu0 %1151
        %v1153 = vsel %vm746, %v1147, -inf
        %1154 = vmax.xlane.f32.xlu0 %v1153
        %v1155 = vpop.xlane.xlu0 %1154
        %v1156 = vsub.f32 %v1142, %v1152
        %v1157 = vsub.f32 %v1147, %v1155
        %v1158 = vmul.f32 %v1156, 1.442695
        %v1159 = vpow.pop %v1158
        %v1160 = vmul.f32 %v1157, 1.442695
        %v1161 = vpow.pop %v1160
        %v1162 = vsel %vm746, %v1159, 0.0
        %1163 = vadd.xlane.f32.xlu0 %v1162
        %v1164 = vpop.xlane.xlu0 %1163
        %v1165 = vsel %vm746, %v1161, 0.0
        %1166 = vadd.xlane.f32.xlu0 %v1165
        %v1167 = vpop.xlane.xlu0 %1166
        %1169 = vrot.lane.b32.xlu0 %v1061, 96
        %v1170 = vpop.permute.xlu0 %1169
        %v1173 = vsel %vm746, %v1159, 0
        %v1176 = vsel %vm746, %v1161, 0
        %1178 = vmatprep.subr.mxu0 0.0
        %1179 = vmatpush1.msra.mxu0 %v1170
        %1180 = vmatprep.subr.mxu0 0.0
        %1181 = vmatpush1.msra.mxu0 0.0
        %1182 = vmatprep.subr.mxu0 0.0
        %1183 = vmatpush1.msra.mxu0 0.0
        %1184 = vmatprep.subr.mxu0 0.0
        %1185 = vmatpush1.msra.mxu0 0.0
        %1186 = vmatprep.subr.mxu0 0.0
        %1187 = vmatpush1.msra.mxu0 0.0
        %1188 = vmatprep.subr.mxu0 0.0
        %1189 = vmatpush1.msra.mxu0 0.0
        %1190 = vmatprep.subr.mxu0 0.0
        %1191 = vmatpush1.msra.mxu0 0.0
        %1192 = vmatprep.subr.mxu0 0.0
        %1193 = vmatpush1.msra.mxu0 0.0
        %1194 = vmatprep.subr.mxu0 0.0
        %1195 = vmatpush1.msra.mxu0 0.0
        %1196 = vmatprep.subr.mxu0 0.0
        %1197 = vmatpush1.msra.mxu0 0.0
        %1198 = vmatprep.subr.mxu0 0.0
        %1199 = vmatpush1.msra.mxu0 0.0
        %1200 = vmatprep.subr.mxu0 0.0
        %1201 = vmatpush1.msra.mxu0 0.0
        %1202 = vmatprep.subr.mxu0 0.0
        %1203 = vmatpush1.msra.mxu0 0.0
        %1204 = vmatprep.subr.mxu0 0.0
        %1205 = vmatpush1.msra.mxu0 0.0
        %1206 = vmatprep.subr.mxu0 0.0
        %1207 = vmatpush1.msra.mxu0 0.0
        %1208 = vmatprep.subr.mxu0 0.0
        %1209 = vmatpush1.msra.mxu0 0.0
        %1210 = vmatprep.subr.mxu0 0.0
        %1211 = vmatpush1.msra.mxu0 0.0
        %1212 = vmatprep.subr.mxu0 0.0
        %1213 = vmatpush1.msra.mxu0 0.0
        %1214 = vmatprep.subr.mxu0 0.0
        %1215 = vmatpush1.msra.mxu0 0.0
        %1216 = vmatprep.subr.mxu0 0.0
        %1217 = vmatpush1.msra.mxu0 0.0
        %1218 = vmatprep.subr.mxu0 0.0
        %1219 = vmatpush1.msra.mxu0 0.0
        %1220 = vmatprep.subr.mxu0 0.0
        %1221 = vmatpush1.msra.mxu0 0.0
        %1222 = vmatprep.subr.mxu0 0.0
        %1223 = vmatpush1.msra.mxu0 0.0
        %1224 = vmatprep.subr.mxu0 0.0
        %1225 = vmatpush1.msra.mxu0 0.0
        %1226 = vmatprep.subr.mxu0 0.0
        %1227 = vmatpush1.msra.mxu0 0.0
        %1228 = vmatprep.subr.mxu0 0.0
        %1229 = vmatpush1.msra.mxu0 0.0
        %1230 = vmatprep.subr.mxu0 0.0
        %1231 = vmatpush1.msra.mxu0 0.0
        %1232 = vmatprep.subr.mxu0 0.0
        %1233 = vmatpush1.msra.mxu0 0.0
        %1234 = vmatprep.subr.mxu0 0.0
        %1235 = vmatpush1.msra.mxu0 0.0
        %1236 = vmatprep.subr.mxu0 0.0
        %1237 = vmatpush1.msra.mxu0 0.0
        %1238 = vmatprep.subr.mxu0 0.0
        %1239 = vmatpush1.msra.mxu0 0.0
        %1240 = vmatprep.subr.mxu0 0.0
        %1241 = vmatpush1.msra.mxu0 0.0
        %1242 = vmatprep.mubr.f32.mxu0 0.0
        %1243 = vmatmul.mubr.f32.gmra.mrb[0].mxu0 %v1173
        %v1244 = vpop.f32.mrb[0].mxu0
        %v1245 = vadd.f32 0.0, %v1244
        %v1246 = vpop.f32.mrb[0].mxu0
        %1247 = vmatprep.mubr.f32.mxu0 0.0
        %1248 = vmatmul.mubr.f32.gmra.mrb[0].mxu0 %v1176
        %v1249 = vpop.f32.mrb[0].mxu0
        %v1250 = vadd.f32 0.0, %v1249
        %v1251 = vpop.f32.mrb[0].mxu0
        %1252 = vdwg.mxu0
        %v1253 = vrcp.pop %v1164
        %v1254 = vmul.f32 %v1245, %v1253
        %v1255 = vrcp.pop %v1167
        %v1256 = vmul.f32 %v1250, %v1255
        %1259 = vrot.lane.b32.xlu0 %v1254, 32
        %v1260 = vpop.permute.xlu0 %1259
        %1261 = vrot.lane.b32.xlu0 %v1256, 32
        %v1262 = vpop.permute.xlu0 %1261
        %vm1265 = vcmask 392448
        %1266 = vst.msk [vmem:[#allocation4] sm:$0xff] %vm1265, %v1260
        %1267 = vst.msk [vmem:[#allocation4 + $0x8] sm:$0xff] %vm1265, %v1262
        %v1268 = vld [vmem:[#allocation2] sm:$0xff]
        %v1269 = vld [vmem:[#allocation3] sm:$0xff]
        %1270 = vrot.lane.b32.xlu0 %v651, 80
        %v1271 = vpop.permute.xlu0 %1270
        %1272 = vrot.lane.b32.xlu0 %v656, 80
        %v1273 = vpop.permute.xlu0 %1272
        %1275 = vrot.lane.b32.xlu0 %v1268, 80
        %v1276 = vpop.permute.xlu0 %1275
        %v1277 = vsel %vm661, %v1271, 0
        %v1279 = vsel %vm661, %v1273, 0
        %v1281 = vsel %vm661, %v1276, 0
        %1283 = vmatprep.subr.mxu0 0.0
        %1284 = vmatpush1.xpose.msra.mxu0 %v1281
        %1285 = vmatprep.subr.mxu0 0.0
        %1286 = vmatpush1.xpose.msra.mxu0 0.0
        %1287 = vmatprep.subr.mxu0 0.0
        %1288 = vmatpush1.xpose.msra.mxu0 0.0
        %1289 = vmatprep.subr.mxu0 0.0
        %1290 = vmatpush1.xpose.msra.mxu0 0.0
        %1291 = vmatprep.subr.mxu0 0.0
        %1292 = vmatpush1.xpose.msra.mxu0 0.0
        %1293 = vmatprep.subr.mxu0 0.0
        %1294 = vmatpush1.xpose.msra.mxu0 0.0
        %1295 = vmatprep.subr.mxu0 0.0
        %1296 = vmatpush1.xpose.msra.mxu0 0.0
        %1297 = vmatprep.subr.mxu0 0.0
        %1298 = vmatpush1.xpose.msra.mxu0 0.0
        %1299 = vmatprep.subr.mxu0 0.0
        %1300 = vmatpush1.xpose.msra.mxu0 0.0
        %1301 = vmatprep.subr.mxu0 0.0
        %1302 = vmatpush1.xpose.msra.mxu0 0.0
        %1303 = vmatprep.subr.mxu0 0.0
        %1304 = vmatpush1.xpose.msra.mxu0 0.0
        %1305 = vmatprep.subr.mxu0 0.0
        %1306 = vmatpush1.xpose.msra.mxu0 0.0
        %1307 = vmatprep.subr.mxu0 0.0
        %1308 = vmatpush1.xpose.msra.mxu0 0.0
        %1309 = vmatprep.subr.mxu0 0.0
        %1310 = vmatpush1.xpose.msra.mxu0 0.0
        %1311 = vmatprep.subr.mxu0 0.0
        %1312 = vmatpush1.xpose.msra.mxu0 0.0
        %1313 = vmatprep.subr.mxu0 0.0
        %1314 = vmatpush1.xpose.msra.mxu0 0.0
        %1315 = vmatprep.subr.mxu0 0.0
        %1316 = vmatpush1.xpose.msra.mxu0 0.0
        %1317 = vmatprep.subr.mxu0 0.0
        %1318 = vmatpush1.xpose.msra.mxu0 0.0
        %1319 = vmatprep.subr.mxu0 0.0
        %1320 = vmatpush1.xpose.msra.mxu0 0.0
        %1321 = vmatprep.subr.mxu0 0.0
        %1322 = vmatpush1.xpose.msra.mxu0 0.0
        %1323 = vmatprep.subr.mxu0 0.0
        %1324 = vmatpush1.xpose.msra.mxu0 0.0
        %1325 = vmatprep.subr.mxu0 0.0
        %1326 = vmatpush1.xpose.msra.mxu0 0.0
        %1327 = vmatprep.subr.mxu0 0.0
        %1328 = vmatpush1.xpose.msra.mxu0 0.0
        %1329 = vmatprep.subr.mxu0 0.0
        %1330 = vmatpush1.xpose.msra.mxu0 0.0
        %1331 = vmatprep.subr.mxu0 0.0
        %1332 = vmatpush1.xpose.msra.mxu0 0.0
        %1333 = vmatprep.subr.mxu0 0.0
        %1334 = vmatpush1.xpose.msra.mxu0 0.0
        %1335 = vmatprep.subr.mxu0 0.0
        %1336 = vmatpush1.xpose.msra.mxu0 0.0
        %1337 = vmatprep.subr.mxu0 0.0
        %1338 = vmatpush1.xpose.msra.mxu0 0.0
        %1339 = vmatprep.subr.mxu0 0.0
        %1340 = vmatpush1.xpose.msra.mxu0 0.0
        %1341 = vmatprep.subr.mxu0 0.0
        %1342 = vmatpush1.xpose.msra.mxu0 0.0
        %1343 = vmatprep.subr.mxu0 0.0
        %1344 = vmatpush1.xpose.msra.mxu0 0.0
        %1345 = vmatprep.subr.mxu0 0.0
        %1346 = vmatpush1.xpose.msra.mxu0 0.0
        %1347 = vmatprep.mubr.f32.mxu0 0.0
        %1348 = vmatmul.mubr.f32.gmra.mrb[0].mxu0 %v1277
        %v1349 = vpop.f32.mrb[0].mxu0
        %v1350 = vadd.f32 0.0, %v1349
        %v1351 = vpop.f32.mrb[0].mxu0
        %1352 = vmatprep.mubr.f32.mxu0 0.0
        %1353 = vmatmul.mubr.f32.gmra.mrb[0].mxu0 %v1279
        %v1354 = vpop.f32.mrb[0].mxu0
        %v1355 = vadd.f32 0.0, %v1354
        %v1356 = vpop.f32.mrb[0].mxu0
        %1357 = vdwg.mxu0
        %v1358 = vsel %vm746, %v1350, -inf
        %1359 = vmax.xlane.f32.xlu0 %v1358
        %v1360 = vpop.xlane.xlu0 %1359
        %v1361 = vsel %vm746, %v1355, -inf
        %1362 = vmax.xlane.f32.xlu0 %v1361
        %v1363 = vpop.xlane.xlu0 %1362
        %v1364 = vsub.f32 %v1350, %v1360
        %v1365 = vsub.f32 %v1355, %v1363
        %v1366 = vmul.f32 %v1364, 1.442695
        %v1367 = vpow.pop %v1366
        %v1368 = vmul.f32 %v1365, 1.442695
        %v1369 = vpow.pop %v1368
        %v1370 = vsel %vm746, %v1367, 0.0
        %1371 = vadd.xlane.f32.xlu0 %v1370
        %v1372 = vpop.xlane.xlu0 %1371
        %v1373 = vsel %vm746, %v1369, 0.0
        %1374 = vadd.xlane.f32.xlu0 %v1373
        %v1375 = vpop.xlane.xlu0 %1374
        %1377 = vrot.lane.b32.xlu0 %v1269, 80
        %v1378 = vpop.permute.xlu0 %1377
        %v1381 = vsel %vm746, %v1367, 0
        %v1384 = vsel %vm746, %v1369, 0
        %1386 = vmatprep.subr.mxu0 0.0
        %1387 = vmatpush1.msra.mxu0 %v1378
        %1388 = vmatprep.subr.mxu0 0.0
        %1389 = vmatpush1.msra.mxu0 0.0
        %1390 = vmatprep.subr.mxu0 0.0
        %1391 = vmatpush1.msra.mxu0 0.0
        %1392 = vmatprep.subr.mxu0 0.0
        %1393 = vmatpush1.msra.mxu0 0.0
        %1394 = vmatprep.subr.mxu0 0.0
        %1395 = vmatpush1.msra.mxu0 0.0
        %1396 = vmatprep.subr.mxu0 0.0
        %1397 = vmatpush1.msra.mxu0 0.0
        %1398 = vmatprep.subr.mxu0 0.0
        %1399 = vmatpush1.msra.mxu0 0.0
        %1400 = vmatprep.subr.mxu0 0.0
        %1401 = vmatpush1.msra.mxu0 0.0
        %1402 = vmatprep.subr.mxu0 0.0
        %1403 = vmatpush1.msra.mxu0 0.0
        %1404 = vmatprep.subr.mxu0 0.0
        %1405 = vmatpush1.msra.mxu0 0.0
        %1406 = vmatprep.subr.mxu0 0.0
        %1407 = vmatpush1.msra.mxu0 0.0
        %1408 = vmatprep.subr.mxu0 0.0
        %1409 = vmatpush1.msra.mxu0 0.0
        %1410 = vmatprep.subr.mxu0 0.0
        %1411 = vmatpush1.msra.mxu0 0.0
        %1412 = vmatprep.subr.mxu0 0.0
        %1413 = vmatpush1.msra.mxu0 0.0
        %1414 = vmatprep.subr.mxu0 0.0
        %1415 = vmatpush1.msra.mxu0 0.0
        %1416 = vmatprep.subr.mxu0 0.0
        %1417 = vmatpush1.msra.mxu0 0.0
        %1418 = vmatprep.subr.mxu0 0.0
        %1419 = vmatpush1.msra.mxu0 0.0
        %1420 = vmatprep.subr.mxu0 0.0
        %1421 = vmatpush1.msra.mxu0 0.0
        %1422 = vmatprep.subr.mxu0 0.0
        %1423 = vmatpush1.msra.mxu0 0.0
        %1424 = vmatprep.subr.mxu0 0.0
        %1425 = vmatpush1.msra.mxu0 0.0
        %1426 = vmatprep.subr.mxu0 0.0
        %1427 = vmatpush1.msra.mxu0 0.0
        %1428 = vmatprep.subr.mxu0 0.0
        %1429 = vmatpush1.msra.mxu0 0.0
        %1430 = vmatprep.subr.mxu0 0.0
        %1431 = vmatpush1.msra.mxu0 0.0
        %1432 = vmatprep.subr.mxu0 0.0
        %1433 = vmatpush1.msra.mxu0 0.0
        %1434 = vmatprep.subr.mxu0 0.0
        %1435 = vmatpush1.msra.mxu0 0.0
        %1436 = vmatprep.subr.mxu0 0.0
        %1437 = vmatpush1.msra.mxu0 0.0
        %1438 = vmatprep.subr.mxu0 0.0
        %1439 = vmatpush1.msra.mxu0 0.0
        %1440 = vmatprep.subr.mxu0 0.0
        %1441 = vmatpush1.msra.mxu0 0.0
        %1442 = vmatprep.subr.mxu0 0.0
        %1443 = vmatpush1.msra.mxu0 0.0
        %1444 = vmatprep.subr.mxu0 0.0
        %1445 = vmatpush1.msra.mxu0 0.0
        %1446 = vmatprep.subr.mxu0 0.0
        %1447 = vmatpush1.msra.mxu0 0.0
        %1448 = vmatprep.subr.mxu0 0.0
        %1449 = vmatpush1.msra.mxu0 0.0
        %1450 = vmatprep.mubr.f32.mxu0 0.0
        %1451 = vmatmul.mubr.f32.gmra.mrb[0].mxu0 %v1381
        %v1452 = vpop.f32.mrb[0].mxu0
        %v1453 = vadd.f32 0.0, %v1452
        %v1454 = vpop.f32.mrb[0].mxu0
        %1455 = vmatprep.mubr.f32.mxu0 0.0
        %1456 = vmatmul.mubr.f32.gmra.mrb[0].mxu0 %v1384
        %v1457 = vpop.f32.mrb[0].mxu0
        %v1458 = vadd.f32 0.0, %v1457
        %v1459 = vpop.f32.mrb[0].mxu0
        %1460 = vdwg.mxu0
        %v1461 = vrcp.pop %v1372
        %v1462 = vmul.f32 %v1453, %v1461
        %v1463 = vrcp.pop %v1375
        %v1464 = vmul.f32 %v1458, %v1463
        %1467 = vrot.lane.b32.xlu0 %v1462, 48
        %v1468 = vpop.permute.xlu0 %1467
        %1469 = vrot.lane.b32.xlu0 %v1464, 48
        %v1470 = vpop.permute.xlu0 %1469
        %vm1473 = vcmask 523648
        %1474 = vst.msk [vmem:[#allocation4] sm:$0xff] %vm1473, %v1468
        %1475 = vst.msk [vmem:[#allocation4 + $0x8] sm:$0xff] %vm1473, %v1470
        %v1476 = vld [vmem:[#allocation4] sm:$0xff]
        %v1477 = vld [vmem:[#allocation4 + $0x8] sm:$0xff]
        %v1478 = vld [vmem:[%s6] sm:$0xff]
        %v1479 = vld [vmem:[%s6 + $0x8] sm:$0xff]
        %v1480 = vld [vmem:[%s6 + $0x10] sm:$0xff]
        %v1481 = vld [vmem:[%s6 + $0x18] sm:$0xff]
        %v1482 = vld [vmem:[%s6 + $0x20] sm:$0xff]
        %v1483 = vld [vmem:[%s6 + $0x28] sm:$0xff]
        %v1484 = vld [vmem:[%s6 + $0x30] sm:$0xff]
        %v1485 = vld [vmem:[%s6 + $0x38] sm:$0xff]
        %v1486 = vld [vmem:[%s7] sm:$0x1]
        %v1488 = vlaneseq
        %v1489 = vshrl.u32 %v1488, 7
        %v1490 = vsub.s32 0, %v1489
        %v1491 = vrot.slane %v1486, %v1490
        %vm1493 = vcmask 523264
        %v1495 = vsel %vm1493, %v1476, 0
        %v1498 = vsel %vm1493, %v1477, 0
        %1500 = vmatprep.subr.mxu0 0.0
        %1501 = vmatpush1.msra.mxu0 %v1478
        %1502 = vmatprep.subr.mxu0 0.0
        %1503 = vmatpush1.msra.mxu0 %v1479
        %1504 = vmatprep.subr.mxu0 0.0
        %1505 = vmatpush1.msra.mxu0 %v1480
        %1506 = vmatprep.subr.mxu0 0.0
        %1507 = vmatpush1.msra.mxu0 %v1481
        %1508 = vmatprep.subr.mxu0 0.0
        %1509 = vmatpush1.msra.mxu0 %v1482
        %1510 = vmatprep.subr.mxu0 0.0
        %1511 = vmatpush1.msra.mxu0 %v1483
        %1512 = vmatprep.subr.mxu0 0.0
        %1513 = vmatpush1.msra.mxu0 %v1484
        %1514 = vmatprep.subr.mxu0 0.0
        %1515 = vmatpush1.msra.mxu0 %v1485
        %1516 = vmatprep.subr.mxu0 0.0
        %1517 = vmatpush1.msra.mxu0 0.0
        %1518 = vmatprep.subr.mxu0 0.0
        %1519 = vmatpush1.msra.mxu0 0.0
        %1520 = vmatprep.subr.mxu0 0.0
        %1521 = vmatpush1.msra.mxu0 0.0
        %1522 = vmatprep.subr.mxu0 0.0
        %1523 = vmatpush1.msra.mxu0 0.0
        %1524 = vmatprep.subr.mxu0 0.0
        %1525 = vmatpush1.msra.mxu0 0.0
        %1526 = vmatprep.subr.mxu0 0.0
        %1527 = vmatpush1.msra.mxu0 0.0
        %1528 = vmatprep.subr.mxu0 0.0
        %1529 = vmatpush1.msra.mxu0 0.0
        %1530 = vmatprep.subr.mxu0 0.0
        %1531 = vmatpush1.msra.mxu0 0.0
        %1532 = vmatprep.subr.mxu0 0.0
        %1533 = vmatpush1.msra.mxu0 0.0
        %1534 = vmatprep.subr.mxu0 0.0
        %1535 = vmatpush1.msra.mxu0 0.0
        %1536 = vmatprep.subr.mxu0 0.0
        %1537 = vmatpush1.msra.mxu0 0.0
        %1538 = vmatprep.subr.mxu0 0.0
        %1539 = vmatpush1.msra.mxu0 0.0
        %1540 = vmatprep.subr.mxu0 0.0
        %1541 = vmatpush1.msra.mxu0 0.0
        %1542 = vmatprep.subr.mxu0 0.0
        %1543 = vmatpush1.msra.mxu0 0.0
        %1544 = vmatprep.subr.mxu0 0.0
        %1545 = vmatpush1.msra.mxu0 0.0
        %1546 = vmatprep.subr.mxu0 0.0
        %1547 = vmatpush1.msra.mxu0 0.0
        %1548 = vmatprep.subr.mxu0 0.0
        %1549 = vmatpush1.msra.mxu0 0.0
        %1550 = vmatprep.subr.mxu0 0.0
        %1551 = vmatpush1.msra.mxu0 0.0
        %1552 = vmatprep.subr.mxu0 0.0
        %1553 = vmatpush1.msra.mxu0 0.0
        %1554 = vmatprep.subr.mxu0 0.0
        %1555 = vmatpush1.msra.mxu0 0.0
        %1556 = vmatprep.subr.mxu0 0.0
        %1557 = vmatpush1.msra.mxu0 0.0
        %1558 = vmatprep.subr.mxu0 0.0
        %1559 = vmatpush1.msra.mxu0 0.0
        %1560 = vmatprep.subr.mxu0 0.0
        %1561 = vmatpush1.msra.mxu0 0.0
        %1562 = vmatprep.subr.mxu0 0.0
        %1563 = vmatpush1.msra.mxu0 0.0
        %1564 = vmatprep.mubr.f32.mxu0 0.0
        %1565 = vmatmul.mubr.f32.gmra.mrb[0].mxu0 %v1495
        %v1566 = vpop.f32.mrb[0].mxu0
        %v1567 = vadd.f32 %v1491, %v1566
        %v1568 = vpop.f32.mrb[0].mxu0
        %1569 = vmatprep.mubr.f32.mxu0 0.0
        %1570 = vmatmul.mubr.f32.gmra.mrb[0].mxu0 %v1498
        %v1571 = vpop.f32.mrb[0].mxu0
        %v1572 = vadd.f32 %v1491, %v1571
        %v1573 = vpop.f32.mrb[0].mxu0
        %1574 = vdwg.mxu0
        %1575 = vst.msk [vmem:[%s397] sm:$0xff] %vm577, %v1567
        %1576 = vst.msk [vmem:[%s397 + $0x8] sm:$0xff] %vm577, %v1572
        %s1577 = sand.u32 %s235, 1
        %s1578 = scalar_lea.sflag [#allocation7], %s1577
        %s1579 = sand.u32 %s235, 1
        %s1580 = smul.addr %s1579, 16
        %s1581 = scalar_lea.vmem [#allocation10], %s1580
        // Predicated region
        $region65: #{tpu_custom_call.1} parent=51 // pred_check
          %p1582 = pneg %p245
        $region66: #{tpu_custom_call.1} parent=51 // pred_check_branch
          %1584 = sbr.rel (%p1582) target = $region68
        $region67: #{tpu_custom_call.1} parent=51 // pred_region
          %s1585 = smul.u32 2, %s33
          %s1587 = ssub.s32 256, 256
          %1588 = vsyncadd %s1578, %s1587
          %s1589 = smul.addr %s32, 2
          %s1590 = sadd.s32 %s1585, %s1589
          %s1591 = smul.addr %s1590, 128
          %s1592 = scalar_lea.hbm %s8, %s1591
          %s1593 = sshll.u32 %s1581, 4
          %s1594 = int_to_ptr.vmem [resolvable:$true] %s1593
          %1599 = dma.vmem_to_hbm [thread:$0]  %s1594, 256, %s1592, %s1578, 128, 128, 8
        $region68: #{tpu_custom_call.1} parent=51 // pred_fallthru
          _
      $region52: #{tpu_custom_call.1} parent=5 // pred_fallthru
        _
      %p1600 = scmp.le.s32.totalorder 2, %s23
      // Predicated region
      $region69: #{tpu_custom_call.1} parent=5 // pred_check
        %p1601 = pneg %p1600
      $region70: #{tpu_custom_call.1} parent=5 // pred_check_branch
        %1603 = sbr.rel (%p1601) target = $region72
      $region71: #{tpu_custom_call.1} parent=5 // pred_region
        %s1604 = ssub.s32 %s23, 2
        // Predicated region
        $region73: #{tpu_custom_call.1} parent=71 // pred_check
          %p1605 = pneg %p251
        $region74: #{tpu_custom_call.1} parent=71 // pred_check_branch
          %1607 = sbr.rel (%p1605) target = $region76
        $region75: #{tpu_custom_call.1} parent=71 // pred_region
          %s1608 = sand.u32 %s236, 1
          %s1609 = scalar_lea.sflag [#allocation7], %s1608
          %s1610 = sand.u32 %s236, 1
          %s1611 = smul.addr %s1610, 16
          %s1612 = scalar_lea.vmem [#allocation10], %s1611
          %1613 = dma.done %s1609, 256
        $region76: #{tpu_custom_call.1} parent=71 // pred_fallthru
          _
      $region72: #{tpu_custom_call.1} parent=5 // pred_fallthru
        _
    $region6: #{tpu_custom_call.1} parent=1 // loop_footer
      %s27 = sadd.s32 1, %s23
    $region7: #{tpu_custom_call.1} parent=1 // loop_footer_branch
      %22 = sbr.rel target = $region3
    $region8: #{tpu_custom_call.1} parent=1 // loop_exit
      _
    %1614 = vsyncpa [#allocation6], 1
    %s1615 = scalar_lea.sflag [#allocation6], 1
    %1616 = vsyncpa %s1615, 1
    %1617 = vsyncpa [#allocation9], 1
    %s1618 = scalar_lea.sflag [#allocation9], 1
    %1619 = vsyncpa %s1618, 1
    %1620 = vsyncpa [#allocation7], 1
    %s1621 = scalar_lea.sflag [#allocation7], 1
    %1622 = vsyncpa %s1621, 1

</llo_original>
